<compile_context>
chip_gen: v7x
topology: tpu7x:2x2x1
jax: 0.10.0
libtpu: 0.0.40
codegen_flags: <defaults>
</compile_context>

<pallas_src>
import jax
import jax.numpy as jnp
import numpy as np
from jax.experimental import pallas as pl
from jax.experimental.pallas import tpu as pltpu

# ----------------------------- configuration -------------------------------
D = 32          # model dim
NHEAD = 4       # attention heads
DFF = 64        # MLP hidden dim
LQ = 8          # query sequence length
LK = 16         # key/value sequence length
N = 2           # batch
HEAD_DIM = D // NHEAD
EPS = 1e-5      # nn.LayerNorm default eps

NLQ = LQ * N    # 16 query rows   (row r <-> (l = r // N, n = r % N))
NLK = LK * N    # 32 key rows

# --------------------- packed-parameter slab layout --------------------------
# One lane-dense f32 slab (SLAB_ROWS, 128):
#   rows [0 , D )   : lanes [0,D)=Wa      [D,2D)=Wb      [2D,4D)=Wkv
#   rows [D , 2D)   : lanes [0,D)=Wout*2  [D,3D)=W1
#   rows [D , D+DFF): lanes [3D,4D)=W2
#   rows 2D+0..2D+6 : lanes [0,D)  = b_q, b_out*2, g1, be1, b2, g2, be2
#   rows 2D+0, 2D+1 : lanes [D,3D) = b_kv, b1
SLAB_W = 4 * D          # 128 lanes
SLAB_ROWS = 3 * D       # 96 rows


# ------------------------------- kernel ------------------------------------
def egodeep_attention_kernel(qc_ref, qp_ref, kx_ref, pa_ref, out_ref):
    f32 = jnp.float32

    qc = qc_ref[...]                               # (NLQ, D)
    qp = qp_ref[...]                               # (NLQ, D)
    kx = kx_ref[...]                               # (NLK, D)

    # --- static parameter views (single lane-dense slab) ---------------------
    w_a = pa_ref[0:D, 0:D]                         # (D, D)   qc -> q (scale folded)
    w_b = pa_ref[0:D, D:2 * D]                     # (D, D)   qp -> q (scale folded)
    w_kv = pa_ref[0:D, 2 * D:4 * D]                # (D, 2D)  key -> [k | v]
    w_out = pa_ref[D:2 * D, 0:D]                   # (D, D)   out_proj (x2 folded)
    w_1 = pa_ref[D:2 * D, D:3 * D]                 # (D, DFF) MLP fc1
    w_2 = pa_ref[D:D + DFF, 3 * D:4 * D]           # (DFF, D) MLP fc2
    vec = pa_ref[2 * D:2 * D + 8, :]               # (8, 128) aligned vector block
    b_q, b_out = vec[0:1, 0:D], vec[1:2, 0:D]
    g1, be1 = vec[2:3, 0:D], vec[3:4, 0:D]
    b2 = vec[4:5, 0:D]
    g2, be2 = vec[5:6, 0:D], vec[6:7, 0:D]
    b_kv = vec[0:1, D:3 * D]                       # (1, 2D)
    b_1 = vec[1:2, D:3 * D]                        # (1, DFF)

    # --- fused projections (outer linears + MHA in_proj composed at pack time;
    #     q is already scaled by HEAD_DIM**-0.5) ------------------------------
    q2 = (jnp.dot(qc, w_a, preferred_element_type=f32)
          + jnp.dot(qp, w_b, preferred_element_type=f32) + b_q)      # (NLQ, D)
    kv = jnp.dot(kx, w_kv, preferred_element_type=f32) + b_kv        # (NLK, 2D)
    k2 = kv[:, 0:D]
    v2 = kv[:, D:2 * D]

    # --- attention: all batch rows at once; cross-batch pairs masked ---------
    # Rows are in (l, n) order, so the batch of row r is (r % N): the mask is a
    # compile-time constant additive bias, no batched dots / transposes needed.
    rq = jax.lax.broadcasted_iota(jnp.int32, (NLQ, NLK), 0)
    rk = jax.lax.broadcasted_iota(jnp.int32, (NLQ, NLK), 1)
    neg_bias = jnp.where((rq % N) == (rk % N), 0.0, -1e30).astype(f32)

    heads = []
    for h in range(NHEAD):
        lo = h * HEAD_DIM
        qh = q2[:, lo:lo + HEAD_DIM]                                 # (NLQ, hd)
        kh = k2[:, lo:lo + HEAD_DIM]                                 # (NLK, hd)
        vh = v2[:, lo:lo + HEAD_DIM]                                 # (NLK, hd)
        s = jax.lax.dot_general(qh, kh, (((1,), (1,)), ((), ())),
                                preferred_element_type=f32)          # (NLQ, NLK)
        s = s + neg_bias
        s = s - jnp.max(s, axis=-1, keepdims=True)
        p = jnp.exp(s)
        p = p * pl.reciprocal(jnp.sum(p, axis=-1, keepdims=True), approx=True)
        heads.append(jnp.dot(p, vh, preferred_element_type=f32))     # (NLQ, hd)
    ctx = jnp.concatenate(heads, axis=-1)                            # (NLQ, D)

    # out_proj with the `out + out` residual (exact x2) and bias folded in.
    x = jnp.dot(ctx, w_out, preferred_element_type=f32) + b_out

    # --- LayerNorm1 -----------------------------------------------------------
    mu = jnp.mean(x, axis=-1, keepdims=True)
    var = jnp.mean((x - mu) ** 2, axis=-1, keepdims=True)
    x = (x - mu) * jax.lax.rsqrt(var + EPS) * g1 + be1

    # --- MLP: Linear(D, DFF) -> ReLU -> Linear(DFF, D) ------------------------
    h1 = jnp.maximum(jnp.dot(x, w_1, preferred_element_type=f32) + b_1, 0.0)
    y = jnp.dot(h1, w_2, preferred_element_type=f32) + b2

    # --- residual + LayerNorm2 -------------------------------------------------
    z = x + y
    mu2 = jnp.mean(z, axis=-1, keepdims=True)
    var2 = jnp.mean((z - mu2) ** 2, axis=-1, keepdims=True)
    z = (z - mu2) * jax.lax.rsqrt(var2 + EPS) * g2 + be2

    out_ref[...] = z.astype(out_ref.dtype)


# ------------------------------- wrapper ------------------------------------
@jax.jit
def egodeep_attention(query_content, query_pos, key, slab):
    lq, n, d = query_content.shape
    lk = key.shape[0]
    # (L, N, D) -> (L*N, D): contiguous dim merge == free bitcast (no copies,
    # no transposes, no extra XLA launches around the kernel).
    qc2 = query_content.reshape(lq * n, d)
    qp2 = query_pos.reshape(lq * n, d)
    kx2 = key.reshape(lk * n, d)

    vmem = pl.BlockSpec(memory_space=pltpu.MemorySpace.VMEM)
    out = pl.pallas_call(
        egodeep_attention_kernel,
        out_shape=jax.ShapeDtypeStruct((lq * n, d), query_content.dtype),
        in_specs=[vmem, vmem, vmem, vmem],
        out_specs=vmem,
    )(qc2, qp2, kx2, slab)

    # (L*N, D) -> (L, N, D): free bitcast.
    return out.reshape(lq, n, d)


# --------------------------- parameter setup --------------------------------
def init_params(rng):
    """Deterministic synthetic parameters (PyTorch Linear layout: W is (out, in))."""
    names = ["Wqc", "bqc", "Wqp", "bqp", "Wk", "bk", "Wv", "bv",
             "Wq_in", "bq_in", "Wk_in", "bk_in", "Wv_in", "bv_in",
             "Wout", "bout", "g1", "be1", "W1", "b1", "W2", "b2", "g2", "be2"]
    shapes = {
        "Wqc": (D, D), "bqc": (D,), "Wqp": (D, D), "bqp": (D,),
        "Wk": (D, D), "bk": (D,), "Wv": (D, D), "bv": (D,),
        "Wq_in": (D, D), "bq_in": (D,), "Wk_in": (D, D), "bk_in": (D,),
        "Wv_in": (D, D), "bv_in": (D,),
        "Wout": (D, D), "bout": (D,),
        "g1": (D,), "be1": (D,),
        "W1": (DFF, D), "b1": (DFF,), "W2": (D, DFF), "b2": (D,),
        "g2": (D,), "be2": (D,),
    }
    keys = jax.random.split(rng, len(names))
    p = {}
    for k, name in zip(keys, names):
        if name in ("g1", "g2"):
            p[name] = jnp.ones(shapes[name], jnp.float32) \
                      + 0.05 * jax.random.normal(k, shapes[name], jnp.float32)
        else:
            p[name] = 0.1 * jax.random.normal(k, shapes[name], jnp.float32)
    return p


def pack_params(p):
    """Compose back-to-back linears and pack everything into one lane-dense slab.

    `p` holds PyTorch-layout (out, in) weights.  Composition is done in f32 and
    yields (in, out)-layout effective weights; the HEAD_DIM**-0.5 scale is
    folded into the q weights/bias and the `out + out` residual (x2) plus the
    out_proj bias are folded into the packed out_proj weight/bias.
    """
    with jax.default_matmul_precision("highest"):
        scale = HEAD_DIM ** -0.5
        wq_in_t = p["Wq_in"].T
        w_a = scale * (p["Wqc"].T @ wq_in_t)                             # (D, D)
        w_b = scale * (p["Wqp"].T @ wq_in_t)                             # (D, D)
        b_q = scale * ((p["bqc"] + p["bqp"]) @ wq_in_t + p["bq_in"])     # (D,)

        w_k = p["Wk"].T @ p["Wk_in"].T                                   # (D, D)
        b_k = p["bk"] @ p["Wk_in"].T + p["bk_in"]
        w_v = p["Wv"].T @ p["Wv_in"].T
        b_v = p["bv"] @ p["Wv_in"].T + p["bv_in"]
        w_kv = jnp.concatenate([w_k, w_v], axis=1)                       # (D, 2D)
        b_kv = jnp.concatenate([b_k, b_v])                               # (2D,)

    slab = np.zeros((SLAB_ROWS, SLAB_W), np.float32)
    slab[0:D, 0:D] = np.asarray(w_a)
    slab[0:D, D:2 * D] = np.asarray(w_b)
    slab[0:D, 2 * D:4 * D] = np.asarray(w_kv)
    slab[D:2 * D, 0:D] = 2.0 * np.asarray(p["Wout"]).T          # x2 folds out+out
    slab[D:2 * D, D:3 * D] = np.asarray(p["W1"]).T
    slab[D:D + DFF, 3 * D:4 * D] = np.asarray(p["W2"]).T
    vec7 = np.stack([np.asarray(b_q), 2.0 * np.asarray(p["bout"]),
                     np.asarray(p["g1"]), np.asarray(p["be1"]),
                     np.asarray(p["b2"]), np.asarray(p["g2"]),
                     np.asarray(p["be2"])])
    slab[2 * D:2 * D + 7, 0:D] = vec7
    slab[2 * D, D:3 * D] = np.asarray(b_kv)
    slab[2 * D + 1, D:3 * D] = np.asarray(p["b1"])
    return jnp.asarray(slab)


# --------------------------- pure-JAX reference ------------------------------
def reference(query_content, query_pos, key, p):
    with jax.default_matmul_precision("highest"):
        lin = lambda x, w, b: x @ w.T + b
        q = lin(query_content, p["Wqc"], p["bqc"]) + lin(query_pos, p["Wqp"], p["bqp"])
        k = lin(key, p["Wk"], p["bk"])
        v = lin(key, p["Wv"], p["bv"])
        q2 = lin(q, p["Wq_in"], p["bq_in"]) * (HEAD_DIM ** -0.5)
        k2 = lin(k, p["Wk_in"], p["bk_in"])
        v2 = lin(v, p["Wv_in"], p["bv_in"])
        lq, nb, _ = q2.shape
        lk = k2.shape[0]
        qh = q2.reshape(lq, nb, NHEAD, HEAD_DIM).transpose(1, 2, 0, 3)
        kh = k2.reshape(lk, nb, NHEAD, HEAD_DIM).transpose(1, 2, 0, 3)
        vh = v2.reshape(lk, nb, NHEAD, HEAD_DIM).transpose(1, 2, 0, 3)
        s = jnp.einsum("bhqd,bhkd->bhqk", qh, kh)
        pw = jax.nn.softmax(s, axis=-1)
        o = jnp.einsum("bhqk,bhkd->bhqd", pw, vh)
        o = o.transpose(2, 0, 1, 3).reshape(lq, nb, D)
        out = lin(o, p["Wout"], p["bout"])

        def layernorm(x, g, b):
            m = x.mean(-1, keepdims=True)
            var = ((x - m) ** 2).mean(-1, keepdims=True)
            return (x - m) / jnp.sqrt(var + EPS) * g + b

        x = layernorm(out + out, p["g1"], p["be1"])
        y = lin(jax.nn.relu(lin(x, p["W1"], p["b1"])), p["W2"], p["b2"])
        return layernorm(x + y, p["g2"], p["be2"])


# --------------------------------- main --------------------------------------
if __name__ == "__main__":
    root = jax.random.PRNGKey(0)
    k_qc, k_qp, k_key, k_params = jax.random.split(root, 4)

    query_content = jax.random.normal(k_qc, (LQ, N, D), jnp.float32)
    query_pos = jax.random.normal(k_qp, (LQ, N, D), jnp.float32)
    key = jax.random.normal(k_key, (LK, N, D), jnp.float32)

    params = init_params(k_params)
    slab = pack_params(params)

    out = jax.block_until_ready(
        egodeep_attention(query_content, query_pos, key, slab))
    ref = jax.block_until_ready(reference(query_content, query_pos, key, params))

    assert out.shape == (LQ, N, D), out.shape
    np.testing.assert_allclose(np.asarray(out), np.asarray(ref), rtol=5e-3, atol=5e-3)
    print("KERNEL_OK")
</pallas_src>

<mosaic_0001>
module attributes {stable_mosaic.version = 11 : i64} {
  func.func @egodeep_attention_kernel(%arg0: memref<16x32xf32, #tpu.memory_space<vmem>>, %arg1: memref<16x32xf32, #tpu.memory_space<vmem>>, %arg2: memref<32x32xf32, #tpu.memory_space<vmem>>, %arg3: memref<96x128xf32, #tpu.memory_space<vmem>>, %arg4: memref<16x32xf32, #tpu.memory_space<vmem>>) attributes {dimension_semantics = [], scalar_prefetch = 0 : i64, scratch_operands = 0 : i64, tpu.core_type = #tpu.core_type<tc>} {
    %c0 = arith.constant 0 : index
    %c0_0 = arith.constant 0 : index
    %0 = vector.load %arg0[%c0, %c0_0] : memref<16x32xf32, #tpu.memory_space<vmem>>, vector<16x32xf32>
    %c0_1 = arith.constant 0 : index
    %c0_2 = arith.constant 0 : index
    %1 = vector.load %arg1[%c0_1, %c0_2] : memref<16x32xf32, #tpu.memory_space<vmem>>, vector<16x32xf32>
    %c0_3 = arith.constant 0 : index
    %c0_4 = arith.constant 0 : index
    %2 = vector.load %arg2[%c0_3, %c0_4] : memref<32x32xf32, #tpu.memory_space<vmem>>, vector<32x32xf32>
    %c0_5 = arith.constant 0 : index
    %c0_6 = arith.constant 0 : index
    %3 = vector.load %arg3[%c0_5, %c0_6] : memref<96x128xf32, #tpu.memory_space<vmem>>, vector<32x32xf32>
    %c0_7 = arith.constant 0 : index
    %c32 = arith.constant 32 : index
    %4 = vector.load %arg3[%c0_7, %c32] : memref<96x128xf32, #tpu.memory_space<vmem>>, vector<32x32xf32>
    %c0_8 = arith.constant 0 : index
    %c64 = arith.constant 64 : index
    %5 = vector.load %arg3[%c0_8, %c64] : memref<96x128xf32, #tpu.memory_space<vmem>>, vector<32x64xf32>
    %c32_9 = arith.constant 32 : index
    %c0_10 = arith.constant 0 : index
    %6 = vector.load %arg3[%c32_9, %c0_10] : memref<96x128xf32, #tpu.memory_space<vmem>>, vector<32x32xf32>
    %c32_11 = arith.constant 32 : index
    %c32_12 = arith.constant 32 : index
    %7 = vector.load %arg3[%c32_11, %c32_12] : memref<96x128xf32, #tpu.memory_space<vmem>>, vector<32x64xf32>
    %c32_13 = arith.constant 32 : index
    %c96 = arith.constant 96 : index
    %8 = vector.load %arg3[%c32_13, %c96] : memref<96x128xf32, #tpu.memory_space<vmem>>, vector<64x32xf32>
    %c64_14 = arith.constant 64 : index
    %c0_15 = arith.constant 0 : index
    %9 = vector.load %arg3[%c64_14, %c0_15] : memref<96x128xf32, #tpu.memory_space<vmem>>, vector<8x128xf32>
    %10 = vector.extract_strided_slice %9 {offsets = [0, 0], sizes = [1, 32], strides = [1, 1]} : vector<8x128xf32> to vector<1x32xf32>
    %11 = vector.extract_strided_slice %9 {offsets = [1, 0], sizes = [1, 32], strides = [1, 1]} : vector<8x128xf32> to vector<1x32xf32>
    %12 = vector.extract_strided_slice %9 {offsets = [2, 0], sizes = [1, 32], strides = [1, 1]} : vector<8x128xf32> to vector<1x32xf32>
    %13 = vector.extract_strided_slice %9 {offsets = [3, 0], sizes = [1, 32], strides = [1, 1]} : vector<8x128xf32> to vector<1x32xf32>
    %14 = vector.extract_strided_slice %9 {offsets = [4, 0], sizes = [1, 32], strides = [1, 1]} : vector<8x128xf32> to vector<1x32xf32>
    %15 = vector.extract_strided_slice %9 {offsets = [5, 0], sizes = [1, 32], strides = [1, 1]} : vector<8x128xf32> to vector<1x32xf32>
    %16 = vector.extract_strided_slice %9 {offsets = [6, 0], sizes = [1, 32], strides = [1, 1]} : vector<8x128xf32> to vector<1x32xf32>
    %17 = vector.extract_strided_slice %9 {offsets = [0, 32], sizes = [1, 64], strides = [1, 1]} : vector<8x128xf32> to vector<1x64xf32>
    %18 = vector.extract_strided_slice %9 {offsets = [1, 32], sizes = [1, 64], strides = [1, 1]} : vector<8x128xf32> to vector<1x64xf32>
    %cst = arith.constant dense<0.000000e+00> : vector<16x32xf32>
    %19 = tpu.matmul %0, %3, %cst {dimension_numbers = #tpu.dot_dimension_numbers<[1], [0], [0], [1], [0, 0, 1, 1], [], []>} : vector<16x32xf32>, vector<32x32xf32>, vector<16x32xf32> -> vector<16x32xf32>
    %cst_16 = arith.constant dense<0.000000e+00> : vector<16x32xf32>
    %20 = tpu.matmul %1, %4, %cst_16 {dimension_numbers = #tpu.dot_dimension_numbers<[1], [0], [0], [1], [0, 0, 1, 1], [], []>} : vector<16x32xf32>, vector<32x32xf32>, vector<16x32xf32> -> vector<16x32xf32>
    %21 = arith.addf %19, %20 : vector<16x32xf32>
    %22 = vector.broadcast %10 : vector<1x32xf32> to vector<16x32xf32>
    %23 = arith.addf %21, %22 : vector<16x32xf32>
    %cst_17 = arith.constant dense<0.000000e+00> : vector<32x64xf32>
    %24 = tpu.matmul %2, %5, %cst_17 {dimension_numbers = #tpu.dot_dimension_numbers<[1], [0], [0], [1], [0, 0, 1, 1], [], []>} : vector<32x32xf32>, vector<32x64xf32>, vector<32x64xf32> -> vector<32x64xf32>
    %25 = vector.broadcast %17 : vector<1x64xf32> to vector<32x64xf32>
    %26 = arith.addf %24, %25 : vector<32x64xf32>
    %27 = vector.extract_strided_slice %26 {offsets = [0, 0], sizes = [32, 32], strides = [1, 1]} : vector<32x64xf32> to vector<32x32xf32>
    %28 = vector.extract_strided_slice %26 {offsets = [0, 32], sizes = [32, 32], strides = [1, 1]} : vector<32x64xf32> to vector<32x32xf32>
    %29 = tpu.iota {dimensions = array<i32: 0>} : vector<16x32xi32>
    %30 = tpu.iota {dimensions = array<i32: 1>} : vector<16x32xi32>
    %c2_i32 = arith.constant 2 : i32
    %c0_i32 = arith.constant 0 : i32
    %31 = arith.cmpi eq, %c2_i32, %c0_i32 : i32
    %c1_i32 = arith.constant 1 : i32
    %32 = arith.select %31, %c1_i32, %c2_i32 : i32
    %33 = vector.broadcast %32 : i32 to vector<16x32xi32>
    %34 = arith.remsi %29, %33 : vector<16x32xi32>
    %c0_i32_18 = arith.constant 0 : i32
    %35 = vector.broadcast %c0_i32_18 : i32 to vector<16x32xi32>
    %36 = arith.cmpi ne, %34, %35 : vector<16x32xi32>
    %c0_i32_19 = arith.constant 0 : i32
    %37 = vector.broadcast %c0_i32_19 : i32 to vector<16x32xi32>
    %38 = arith.cmpi slt, %34, %37 : vector<16x32xi32>
    %c0_i32_20 = arith.constant 0 : i32
    %39 = arith.cmpi slt, %32, %c0_i32_20 : i32
    %40 = vector.broadcast %39 : i1 to vector<16x32xi1>
    %41 = vector.broadcast %40 : vector<16x32xi1> to vector<16x32xi1>
    %42 = arith.xori %38, %41 : vector<16x32xi1>
    %43 = arith.andi %42, %36 : vector<16x32xi1>
    %44 = vector.broadcast %32 : i32 to vector<16x32xi32>
    %45 = arith.addi %34, %44 : vector<16x32xi32>
    %46 = arith.select %43, %45, %34 : vector<16x32xi1>, vector<16x32xi32>
    %c2_i32_21 = arith.constant 2 : i32
    %c0_i32_22 = arith.constant 0 : i32
    %47 = arith.cmpi eq, %c2_i32_21, %c0_i32_22 : i32
    %c1_i32_23 = arith.constant 1 : i32
    %48 = arith.select %47, %c1_i32_23, %c2_i32_21 : i32
    %49 = vector.broadcast %48 : i32 to vector<16x32xi32>
    %50 = arith.remsi %30, %49 : vector<16x32xi32>
    %c0_i32_24 = arith.constant 0 : i32
    %51 = vector.broadcast %c0_i32_24 : i32 to vector<16x32xi32>
    %52 = arith.cmpi ne, %50, %51 : vector<16x32xi32>
    %c0_i32_25 = arith.constant 0 : i32
    %53 = vector.broadcast %c0_i32_25 : i32 to vector<16x32xi32>
    %54 = arith.cmpi slt, %50, %53 : vector<16x32xi32>
    %c0_i32_26 = arith.constant 0 : i32
    %55 = arith.cmpi slt, %48, %c0_i32_26 : i32
    %56 = vector.broadcast %55 : i1 to vector<16x32xi1>
    %57 = vector.broadcast %56 : vector<16x32xi1> to vector<16x32xi1>
    %58 = arith.xori %54, %57 : vector<16x32xi1>
    %59 = arith.andi %58, %52 : vector<16x32xi1>
    %60 = vector.broadcast %48 : i32 to vector<16x32xi32>
    %61 = arith.addi %50, %60 : vector<16x32xi32>
    %62 = arith.select %59, %61, %50 : vector<16x32xi1>, vector<16x32xi32>
    %63 = arith.cmpi eq, %46, %62 : vector<16x32xi32>
    %cst_27 = arith.constant 0.000000e+00 : f32
    %cst_28 = arith.constant -1.000000e+30 : f32
    %64 = vector.broadcast %cst_27 : f32 to vector<16x32xf32>
    %65 = vector.broadcast %cst_28 : f32 to vector<16x32xf32>
    %66 = arith.select %63, %64, %65 : vector<16x32xi1>, vector<16x32xf32>
    %67 = vector.extract_strided_slice %23 {offsets = [0, 0], sizes = [16, 8], strides = [1, 1]} : vector<16x32xf32> to vector<16x8xf32>
    %68 = vector.extract_strided_slice %27 {offsets = [0, 0], sizes = [32, 8], strides = [1, 1]} : vector<32x32xf32> to vector<32x8xf32>
    %69 = vector.extract_strided_slice %28 {offsets = [0, 0], sizes = [32, 8], strides = [1, 1]} : vector<32x32xf32> to vector<32x8xf32>
    %cst_29 = arith.constant dense<0.000000e+00> : vector<16x32xf32>
    %70 = tpu.matmul %67, %68, %cst_29 {dimension_numbers = #tpu.dot_dimension_numbers<[1], [1], [0], [0], [0, 0, 1, 0], [], []>} : vector<16x8xf32>, vector<32x8xf32>, vector<16x32xf32> -> vector<16x32xf32>
    %71 = arith.addf %70, %66 : vector<16x32xf32>
    %cst_30 = arith.constant dense<0xFF800000> : vector<16xf32>
    %72 = vector.multi_reduction <maximumf>, %71, %cst_30 [1] : vector<16x32xf32> to vector<16xf32>
    %73 = vector.shape_cast %72 : vector<16xf32> to vector<16x1xf32>
    %74 = vector.broadcast %73 : vector<16x1xf32> to vector<16x32xf32>
    %75 = arith.subf %71, %74 : vector<16x32xf32>
    %76 = math.exp %75 : vector<16x32xf32>
    %cst_31 = arith.constant dense<0.000000e+00> : vector<16xf32>
    %77 = vector.multi_reduction <add>, %76, %cst_31 [1] : vector<16x32xf32> to vector<16xf32>
    %78 = vector.shape_cast %77 : vector<16xf32> to vector<16x1xf32>
    %79 = tpu.reciprocal %78 {approx = true} : vector<16x1xf32> -> vector<16x1xf32>
    %80 = vector.broadcast %79 : vector<16x1xf32> to vector<16x32xf32>
    %81 = arith.mulf %76, %80 : vector<16x32xf32>
    %cst_32 = arith.constant dense<0.000000e+00> : vector<16x8xf32>
    %82 = tpu.matmul %81, %69, %cst_32 {dimension_numbers = #tpu.dot_dimension_numbers<[1], [0], [0], [1], [0, 0, 1, 1], [], []>} : vector<16x32xf32>, vector<32x8xf32>, vector<16x8xf32> -> vector<16x8xf32>
    %83 = vector.extract_strided_slice %23 {offsets = [0, 8], sizes = [16, 8], strides = [1, 1]} : vector<16x32xf32> to vector<16x8xf32>
    %84 = vector.extract_strided_slice %27 {offsets = [0, 8], sizes = [32, 8], strides = [1, 1]} : vector<32x32xf32> to vector<32x8xf32>
    %85 = vector.extract_strided_slice %28 {offsets = [0, 8], sizes = [32, 8], strides = [1, 1]} : vector<32x32xf32> to vector<32x8xf32>
    %cst_33 = arith.constant dense<0.000000e+00> : vector<16x32xf32>
    %86 = tpu.matmul %83, %84, %cst_33 {dimension_numbers = #tpu.dot_dimension_numbers<[1], [1], [0], [0], [0, 0, 1, 0], [], []>} : vector<16x8xf32>, vector<32x8xf32>, vector<16x32xf32> -> vector<16x32xf32>
    %87 = arith.addf %86, %66 : vector<16x32xf32>
    %cst_34 = arith.constant dense<0xFF800000> : vector<16xf32>
    %88 = vector.multi_reduction <maximumf>, %87, %cst_34 [1] : vector<16x32xf32> to vector<16xf32>
    %89 = vector.shape_cast %88 : vector<16xf32> to vector<16x1xf32>
    %90 = vector.broadcast %89 : vector<16x1xf32> to vector<16x32xf32>
    %91 = arith.subf %87, %90 : vector<16x32xf32>
    %92 = math.exp %91 : vector<16x32xf32>
    %cst_35 = arith.constant dense<0.000000e+00> : vector<16xf32>
    %93 = vector.multi_reduction <add>, %92, %cst_35 [1] : vector<16x32xf32> to vector<16xf32>
    %94 = vector.shape_cast %93 : vector<16xf32> to vector<16x1xf32>
    %95 = tpu.reciprocal %94 {approx = true} : vector<16x1xf32> -> vector<16x1xf32>
    %96 = vector.broadcast %95 : vector<16x1xf32> to vector<16x32xf32>
    %97 = arith.mulf %92, %96 : vector<16x32xf32>
    %cst_36 = arith.constant dense<0.000000e+00> : vector<16x8xf32>
    %98 = tpu.matmul %97, %85, %cst_36 {dimension_numbers = #tpu.dot_dimension_numbers<[1], [0], [0], [1], [0, 0, 1, 1], [], []>} : vector<16x32xf32>, vector<32x8xf32>, vector<16x8xf32> -> vector<16x8xf32>
    %99 = vector.extract_strided_slice %23 {offsets = [0, 16], sizes = [16, 8], strides = [1, 1]} : vector<16x32xf32> to vector<16x8xf32>
    %100 = vector.extract_strided_slice %27 {offsets = [0, 16], sizes = [32, 8], strides = [1, 1]} : vector<32x32xf32> to vector<32x8xf32>
    %101 = vector.extract_strided_slice %28 {offsets = [0, 16], sizes = [32, 8], strides = [1, 1]} : vector<32x32xf32> to vector<32x8xf32>
    %cst_37 = arith.constant dense<0.000000e+00> : vector<16x32xf32>
    %102 = tpu.matmul %99, %100, %cst_37 {dimension_numbers = #tpu.dot_dimension_numbers<[1], [1], [0], [0], [0, 0, 1, 0], [], []>} : vector<16x8xf32>, vector<32x8xf32>, vector<16x32xf32> -> vector<16x32xf32>
    %103 = arith.addf %102, %66 : vector<16x32xf32>
    %cst_38 = arith.constant dense<0xFF800000> : vector<16xf32>
    %104 = vector.multi_reduction <maximumf>, %103, %cst_38 [1] : vector<16x32xf32> to vector<16xf32>
    %105 = vector.shape_cast %104 : vector<16xf32> to vector<16x1xf32>
    %106 = vector.broadcast %105 : vector<16x1xf32> to vector<16x32xf32>
    %107 = arith.subf %103, %106 : vector<16x32xf32>
    %108 = math.exp %107 : vector<16x32xf32>
    %cst_39 = arith.constant dense<0.000000e+00> : vector<16xf32>
    %109 = vector.multi_reduction <add>, %108, %cst_39 [1] : vector<16x32xf32> to vector<16xf32>
    %110 = vector.shape_cast %109 : vector<16xf32> to vector<16x1xf32>
    %111 = tpu.reciprocal %110 {approx = true} : vector<16x1xf32> -> vector<16x1xf32>
    %112 = vector.broadcast %111 : vector<16x1xf32> to vector<16x32xf32>
    %113 = arith.mulf %108, %112 : vector<16x32xf32>
    %cst_40 = arith.constant dense<0.000000e+00> : vector<16x8xf32>
    %114 = tpu.matmul %113, %101, %cst_40 {dimension_numbers = #tpu.dot_dimension_numbers<[1], [0], [0], [1], [0, 0, 1, 1], [], []>} : vector<16x32xf32>, vector<32x8xf32>, vector<16x8xf32> -> vector<16x8xf32>
    %115 = vector.extract_strided_slice %23 {offsets = [0, 24], sizes = [16, 8], strides = [1, 1]} : vector<16x32xf32> to vector<16x8xf32>
    %116 = vector.extract_strided_slice %27 {offsets = [0, 24], sizes = [32, 8], strides = [1, 1]} : vector<32x32xf32> to vector<32x8xf32>
    %117 = vector.extract_strided_slice %28 {offsets = [0, 24], sizes = [32, 8], strides = [1, 1]} : vector<32x32xf32> to vector<32x8xf32>
    %cst_41 = arith.constant dense<0.000000e+00> : vector<16x32xf32>
    %118 = tpu.matmul %115, %116, %cst_41 {dimension_numbers = #tpu.dot_dimension_numbers<[1], [1], [0], [0], [0, 0, 1, 0], [], []>} : vector<16x8xf32>, vector<32x8xf32>, vector<16x32xf32> -> vector<16x32xf32>
    %119 = arith.addf %118, %66 : vector<16x32xf32>
    %cst_42 = arith.constant dense<0xFF800000> : vector<16xf32>
    %120 = vector.multi_reduction <maximumf>, %119, %cst_42 [1] : vector<16x32xf32> to vector<16xf32>
    %121 = vector.shape_cast %120 : vector<16xf32> to vector<16x1xf32>
    %122 = vector.broadcast %121 : vector<16x1xf32> to vector<16x32xf32>
    %123 = arith.subf %119, %122 : vector<16x32xf32>
    %124 = math.exp %123 : vector<16x32xf32>
    %cst_43 = arith.constant dense<0.000000e+00> : vector<16xf32>
    %125 = vector.multi_reduction <add>, %124, %cst_43 [1] : vector<16x32xf32> to vector<16xf32>
    %126 = vector.shape_cast %125 : vector<16xf32> to vector<16x1xf32>
    %127 = tpu.reciprocal %126 {approx = true} : vector<16x1xf32> -> vector<16x1xf32>
    %128 = vector.broadcast %127 : vector<16x1xf32> to vector<16x32xf32>
    %129 = arith.mulf %124, %128 : vector<16x32xf32>
    %cst_44 = arith.constant dense<0.000000e+00> : vector<16x8xf32>
    %130 = tpu.matmul %129, %117, %cst_44 {dimension_numbers = #tpu.dot_dimension_numbers<[1], [0], [0], [1], [0, 0, 1, 1], [], []>} : vector<16x32xf32>, vector<32x8xf32>, vector<16x8xf32> -> vector<16x8xf32>
    %131 = tpu.concatenate %82, %98, %114, %130 in 1 : vector<16x8xf32>, vector<16x8xf32>, vector<16x8xf32>, vector<16x8xf32> -> vector<16x32xf32>
    %cst_45 = arith.constant dense<0.000000e+00> : vector<16x32xf32>
    %132 = tpu.matmul %131, %6, %cst_45 {dimension_numbers = #tpu.dot_dimension_numbers<[1], [0], [0], [1], [0, 0, 1, 1], [], []>} : vector<16x32xf32>, vector<32x32xf32>, vector<16x32xf32> -> vector<16x32xf32>
    %133 = vector.broadcast %11 : vector<1x32xf32> to vector<16x32xf32>
    %134 = arith.addf %132, %133 : vector<16x32xf32>
    %cst_46 = arith.constant dense<0.000000e+00> : vector<16xf32>
    %135 = vector.multi_reduction <add>, %134, %cst_46 [1] : vector<16x32xf32> to vector<16xf32>
    %136 = vector.shape_cast %135 : vector<16xf32> to vector<16x1xf32>
    %cst_47 = arith.constant 3.200000e+01 : f32
    %137 = vector.broadcast %cst_47 : f32 to vector<16x1xf32>
    %138 = arith.divf %136, %137 : vector<16x1xf32>
    %139 = vector.broadcast %138 : vector<16x1xf32> to vector<16x32xf32>
    %140 = arith.subf %134, %139 : vector<16x32xf32>
    %141 = arith.mulf %140, %140 : vector<16x32xf32>
    %cst_48 = arith.constant dense<0.000000e+00> : vector<16xf32>
    %142 = vector.multi_reduction <add>, %141, %cst_48 [1] : vector<16x32xf32> to vector<16xf32>
    %143 = vector.shape_cast %142 : vector<16xf32> to vector<16x1xf32>
    %cst_49 = arith.constant 3.200000e+01 : f32
    %144 = vector.broadcast %cst_49 : f32 to vector<16x1xf32>
    %145 = arith.divf %143, %144 : vector<16x1xf32>
    %146 = vector.broadcast %138 : vector<16x1xf32> to vector<16x32xf32>
    %147 = arith.subf %134, %146 : vector<16x32xf32>
    %cst_50 = arith.constant 9.99999974E-6 : f32
    %148 = vector.broadcast %cst_50 : f32 to vector<16x1xf32>
    %149 = arith.addf %145, %148 : vector<16x1xf32>
    %150 = math.rsqrt %149 : vector<16x1xf32>
    %151 = vector.broadcast %150 : vector<16x1xf32> to vector<16x32xf32>
    %152 = arith.mulf %147, %151 : vector<16x32xf32>
    %153 = vector.broadcast %12 : vector<1x32xf32> to vector<16x32xf32>
    %154 = arith.mulf %152, %153 : vector<16x32xf32>
    %155 = vector.broadcast %13 : vector<1x32xf32> to vector<16x32xf32>
    %156 = arith.addf %154, %155 : vector<16x32xf32>
    %cst_51 = arith.constant dense<0.000000e+00> : vector<16x64xf32>
    %157 = tpu.matmul %156, %7, %cst_51 {dimension_numbers = #tpu.dot_dimension_numbers<[1], [0], [0], [1], [0, 0, 1, 1], [], []>} : vector<16x32xf32>, vector<32x64xf32>, vector<16x64xf32> -> vector<16x64xf32>
    %158 = vector.broadcast %18 : vector<1x64xf32> to vector<16x64xf32>
    %159 = arith.addf %157, %158 : vector<16x64xf32>
    %cst_52 = arith.constant 0.000000e+00 : f32
    %160 = vector.broadcast %cst_52 : f32 to vector<16x64xf32>
    %161 = arith.maximumf %159, %160 : vector<16x64xf32>
    %cst_53 = arith.constant dense<0.000000e+00> : vector<16x32xf32>
    %162 = tpu.matmul %161, %8, %cst_53 {dimension_numbers = #tpu.dot_dimension_numbers<[1], [0], [0], [1], [0, 0, 1, 1], [], []>} : vector<16x64xf32>, vector<64x32xf32>, vector<16x32xf32> -> vector<16x32xf32>
    %163 = vector.broadcast %14 : vector<1x32xf32> to vector<16x32xf32>
    %164 = arith.addf %162, %163 : vector<16x32xf32>
    %165 = arith.addf %156, %164 : vector<16x32xf32>
    %cst_54 = arith.constant dense<0.000000e+00> : vector<16xf32>
    %166 = vector.multi_reduction <add>, %165, %cst_54 [1] : vector<16x32xf32> to vector<16xf32>
    %167 = vector.shape_cast %166 : vector<16xf32> to vector<16x1xf32>
    %cst_55 = arith.constant 3.200000e+01 : f32
    %168 = vector.broadcast %cst_55 : f32 to vector<16x1xf32>
    %169 = arith.divf %167, %168 : vector<16x1xf32>
    %170 = vector.broadcast %169 : vector<16x1xf32> to vector<16x32xf32>
    %171 = arith.subf %165, %170 : vector<16x32xf32>
    %172 = arith.mulf %171, %171 : vector<16x32xf32>
    %cst_56 = arith.constant dense<0.000000e+00> : vector<16xf32>
    %173 = vector.multi_reduction <add>, %172, %cst_56 [1] : vector<16x32xf32> to vector<16xf32>
    %174 = vector.shape_cast %173 : vector<16xf32> to vector<16x1xf32>
    %cst_57 = arith.constant 3.200000e+01 : f32
    %175 = vector.broadcast %cst_57 : f32 to vector<16x1xf32>
    %176 = arith.divf %174, %175 : vector<16x1xf32>
    %177 = vector.broadcast %169 : vector<16x1xf32> to vector<16x32xf32>
    %178 = arith.subf %165, %177 : vector<16x32xf32>
    %cst_58 = arith.constant 9.99999974E-6 : f32
    %179 = vector.broadcast %cst_58 : f32 to vector<16x1xf32>
    %180 = arith.addf %176, %179 : vector<16x1xf32>
    %181 = math.rsqrt %180 : vector<16x1xf32>
    %182 = vector.broadcast %181 : vector<16x1xf32> to vector<16x32xf32>
    %183 = arith.mulf %178, %182 : vector<16x32xf32>
    %184 = vector.broadcast %15 : vector<1x32xf32> to vector<16x32xf32>
    %185 = arith.mulf %183, %184 : vector<16x32xf32>
    %186 = vector.broadcast %16 : vector<1x32xf32> to vector<16x32xf32>
    %187 = arith.addf %185, %186 : vector<16x32xf32>
    %c0_59 = arith.constant 0 : index
    %c0_60 = arith.constant 0 : index
    %188 = vector.load %arg4[%c0_59, %c0_60] : memref<16x32xf32, #tpu.memory_space<vmem>>, vector<16x32xf32>
    tpu.vector_store %arg4[%c0_59, %c0_60], %187 {strides = array<i32>} : memref<16x32xf32, #tpu.memory_space<vmem>>, vector<16x32xf32>,
    return
  }
}

</mosaic_0001>

<llo_original>
// kernel: egodeep_attention.1
$region0: #{egodeep_attention.1}
  #allocation0 [shape = 'u32[]', space=smem, size = 0x4, offset = 0x4, fixed_abs, tag = 'smem constant byte address 0x4 - core index']
  #allocation1 [shape = 'u32[144,128]{1,0:T(1,128)}', space=vmem, size = 0x12000, scoped, tag = 'internal scratch']
  %s0 = inlined_call_operand.hbm [shape: f32[16,32], index: 0, kind: input, shape index: {}]
  %s1 = inlined_call_operand.hbm [shape: f32[16,32], index: 1, kind: input, shape index: {}]
  %s2 = inlined_call_operand.hbm [shape: f32[32,32], index: 2, kind: input, shape index: {}]
  %s3 = inlined_call_operand.hbm [shape: f32[96,128], index: 3, kind: input, shape index: {}]
  %s4 = inlined_call_operand.hbm [shape: f32[16,32], index: 4, kind: output, shape index: {}]
  %s5 = sld [smem:[#allocation0]]
  $region42: #{egodeep_attention.1} parent=0
    _
  %s7 = ssub.s32 1, %s5
  %s8 = scalar_select 0, %s7, %s5
  $region1: #{egodeep_attention.1} parent=0
    #allocation2 [shape = 'u8[8192]{0}', space=vmem, size = 0x2000, scoped, tag = 'input window, operand 0, single buffered']
    #allocation3 [shape = 's32[1]{0}', space=sflag, size = 0x4, scoped, tag = 'scoped memory for egodeep_attention.1']
    #allocation4 [shape = 's32[1]{0}', space=sflag, size = 0x4, scoped, tag = 'scoped memory for egodeep_attention.1']
    #allocation5 [shape = 'u8[8192]{0}', space=vmem, size = 0x2000, scoped, tag = 'input window, operand 1, single buffered']
    #allocation6 [shape = 's32[1]{0}', space=sflag, size = 0x4, scoped, tag = 'scoped memory for egodeep_attention.1']
    #allocation7 [shape = 'u8[16384]{0}', space=vmem, size = 0x4000, scoped, tag = 'input window, operand 2, single buffered']
    #allocation8 [shape = 'u8[49152]{0}', space=vmem, size = 0xc000, scoped, tag = 'input window, operand 3, single buffered']
    #allocation9 [shape = 's32[1]{0}', space=sflag, size = 0x4, scoped, tag = 'scoped memory for egodeep_attention.1']
    #allocation10 [shape = 'u8[8192]{0}', space=vmem, size = 0x2000, scoped, tag = 'output window, operand 0, single buffered']
    %9 = vsyncpa [#allocation3], 0
    %10 = vsyncpa [#allocation6], 0
    %11 = vsyncpa [#allocation9], 0
    %12 = vsyncpa [#allocation4], 0
    // Predicated region
    $region2: #{egodeep_attention.1} parent=1 // pred_check
      _
    $region3: #{egodeep_attention.1} parent=1 // pred_check_branch
      %14 = sbr.rel (0) target = $region5
    $region4: #{egodeep_attention.1} parent=1 // pred_region
      %s16 = ssub.s32 256, 256
      %17 = vsyncadd [#allocation3], %s16
      %s18 = sshll.u32 [#allocation2], 4
      %s19 = int_to_ptr.vmem [resolvable:$true] %s18
      %24 = dma.hbm_to_vmem [thread:$0]  %s0, 256, %s19, [#allocation3], 128, 128, 8
    $region5: #{egodeep_attention.1} parent=1 // pred_fallthru
      _
    // Predicated region
    $region6: #{egodeep_attention.1} parent=1 // pred_check
      _
    $region7: #{egodeep_attention.1} parent=1 // pred_check_branch
      %26 = sbr.rel (0) target = $region9
    $region8: #{egodeep_attention.1} parent=1 // pred_region
      %s28 = ssub.s32 256, 256
      %29 = vsyncadd [#allocation6], %s28
      %s30 = sshll.u32 [#allocation5], 4
      %s31 = int_to_ptr.vmem [resolvable:$true] %s30
      %36 = dma.hbm_to_vmem [thread:$0]  %s1, 256, %s31, [#allocation6], 128, 128, 8
    $region9: #{egodeep_attention.1} parent=1 // pred_fallthru
      _
    // Predicated region
    $region10: #{egodeep_attention.1} parent=1 // pred_check
      _
    $region11: #{egodeep_attention.1} parent=1 // pred_check_branch
      %38 = sbr.rel (0) target = $region13
    $region12: #{egodeep_attention.1} parent=1 // pred_region
      %s40 = ssub.s32 512, 512
      %41 = vsyncadd [#allocation6], %s40
      %s42 = sshll.u32 [#allocation7], 4
      %s43 = int_to_ptr.vmem [resolvable:$true] %s42
      %48 = dma.hbm_to_vmem [thread:$0]  %s2, 512, %s43, [#allocation6], 128, 128, 8
    $region13: #{egodeep_attention.1} parent=1 // pred_fallthru
      _
    // Predicated region
    $region14: #{egodeep_attention.1} parent=1 // pred_check
      _
    $region15: #{egodeep_attention.1} parent=1 // pred_check_branch
      %50 = sbr.rel (0) target = $region17
    $region16: #{egodeep_attention.1} parent=1 // pred_region
      %s52 = ssub.s32 1536, 1536
      %53 = vsyncadd [#allocation9], %s52
      %s54 = sshll.u32 [#allocation8], 4
      %s55 = int_to_ptr.vmem [resolvable:$true] %s54
      %60 = dma.hbm_to_vmem [thread:$0]  %s3, 1536, %s55, [#allocation9], 128, 128, 8
    $region17: #{egodeep_attention.1} parent=1 // pred_fallthru
      _
    // Predicated region
    $region18: #{egodeep_attention.1} parent=1 // pred_check
      _
    $region19: #{egodeep_attention.1} parent=1 // pred_check_branch
      %62 = sbr.rel (0) target = $region21
    $region20: #{egodeep_attention.1} parent=1 // pred_region
      %63 = dma.done [#allocation3], 256
    $region21: #{egodeep_attention.1} parent=1 // pred_fallthru
      _
    // Predicated region
    $region22: #{egodeep_attention.1} parent=1 // pred_check
      _
    $region23: #{egodeep_attention.1} parent=1 // pred_check_branch
      %65 = sbr.rel (0) target = $region25
    $region24: #{egodeep_attention.1} parent=1 // pred_region
      %66 = dma.done [#allocation6], 256
    $region25: #{egodeep_attention.1} parent=1 // pred_fallthru
      _
    // Predicated region
    $region26: #{egodeep_attention.1} parent=1 // pred_check
      _
    $region27: #{egodeep_attention.1} parent=1 // pred_check_branch
      %68 = sbr.rel (0) target = $region29
    $region28: #{egodeep_attention.1} parent=1 // pred_region
      %69 = dma.done [#allocation6], 512
    $region29: #{egodeep_attention.1} parent=1 // pred_fallthru
      _
    // Predicated region
    $region30: #{egodeep_attention.1} parent=1 // pred_check
      _
    $region31: #{egodeep_attention.1} parent=1 // pred_check_branch
      %71 = sbr.rel (0) target = $region33
    $region32: #{egodeep_attention.1} parent=1 // pred_region
      %72 = dma.done [#allocation9], 1536
    $region33: #{egodeep_attention.1} parent=1 // pred_fallthru
      _
    %v73 = vld [vmem:[#allocation2] sm:$0xff]
    %v74 = vld [vmem:[#allocation2 + $0x8] sm:$0xff]
    %v75 = vld [vmem:[#allocation5] sm:$0xff]
    %v76 = vld [vmem:[#allocation5 + $0x8] sm:$0xff]
    %v77 = vld [vmem:[#allocation7] sm:$0xff]
    %v78 = vld [vmem:[#allocation7 + $0x8] sm:$0xff]
    %v79 = vld [vmem:[#allocation7 + $0x10] sm:$0xff]
    %v80 = vld [vmem:[#allocation7 + $0x18] sm:$0xff]
    %v81 = vld [vmem:[#allocation8] sm:$0xff]
    %v82 = vld [vmem:[#allocation8 + $0x8] sm:$0xff]
    %v83 = vld [vmem:[#allocation8 + $0x10] sm:$0xff]
    %v84 = vld [vmem:[#allocation8 + $0x18] sm:$0xff]
    %v85 = vld [vmem:[#allocation8 + $0x20] sm:$0xff]
    %v86 = vld [vmem:[#allocation8 + $0x28] sm:$0xff]
    %v87 = vld [vmem:[#allocation8 + $0x30] sm:$0xff]
    %v88 = vld [vmem:[#allocation8 + $0x38] sm:$0xff]
    %v89 = vld [vmem:[#allocation8 + $0x20] sm:$0xff]
    %v90 = vld [vmem:[#allocation8 + $0x28] sm:$0xff]
    %v91 = vld [vmem:[#allocation8 + $0x30] sm:$0xff]
    %v92 = vld [vmem:[#allocation8 + $0x38] sm:$0xff]
    %v93 = vld [vmem:[#allocation8 + $0x40] sm:$0xff]
    %v94 = vld [vmem:[#allocation8 + $0x48] sm:$0xff]
    %v95 = vld [vmem:[#allocation8 + $0x50] sm:$0xff]
    %v96 = vld [vmem:[#allocation8 + $0x58] sm:$0xff]
    %v97 = vld [vmem:[#allocation8 + $0x40] sm:$0xff]
    %102 = vrot.lane.b32.xlu0 %v81, 96
    %v103 = vpop.permute.xlu0 %102
    %104 = vrot.lane.b32.xlu0 %v82, 96
    %v105 = vpop.permute.xlu0 %104
    %106 = vrot.lane.b32.xlu0 %v83, 96
    %v107 = vpop.permute.xlu0 %106
    %108 = vrot.lane.b32.xlu0 %v84, 96
    %v109 = vpop.permute.xlu0 %108
    %vm114 = vcmask 261120
    %v116 = vsel %vm114, %v75, 0
    %v119 = vsel %vm114, %v76, 0
    %121 = vmatprep.subr.mxu0 0.0
    %122 = vmatpush1.msra.mxu0 %v103
    %123 = vmatprep.subr.mxu0 0.0
    %124 = vmatpush1.msra.mxu0 %v105
    %125 = vmatprep.subr.mxu0 0.0
    %126 = vmatpush1.msra.mxu0 %v107
    %127 = vmatprep.subr.mxu0 0.0
    %128 = vmatpush1.msra.mxu0 %v109
    %129 = vmatprep.subr.mxu0 0.0
    %130 = vmatpush1.msra.mxu0 0.0
    %131 = vmatprep.subr.mxu0 0.0
    %132 = vmatpush1.msra.mxu0 0.0
    %133 = vmatprep.subr.mxu0 0.0
    %134 = vmatpush1.msra.mxu0 0.0
    %135 = vmatprep.subr.mxu0 0.0
    %136 = vmatpush1.msra.mxu0 0.0
    %137 = vmatprep.subr.mxu0 0.0
    %138 = vmatpush1.msra.mxu0 0.0
    %139 = vmatprep.subr.mxu0 0.0
    %140 = vmatpush1.msra.mxu0 0.0
    %141 = vmatprep.subr.mxu0 0.0
    %142 = vmatpush1.msra.mxu0 0.0
    %143 = vmatprep.subr.mxu0 0.0
    %144 = vmatpush1.msra.mxu0 0.0
    %145 = vmatprep.subr.mxu0 0.0
    %146 = vmatpush1.msra.mxu0 0.0
    %147 = vmatprep.subr.mxu0 0.0
    %148 = vmatpush1.msra.mxu0 0.0
    %149 = vmatprep.subr.mxu0 0.0
    %150 = vmatpush1.msra.mxu0 0.0
    %151 = vmatprep.subr.mxu0 0.0
    %152 = vmatpush1.msra.mxu0 0.0
    %153 = vmatprep.subr.mxu0 0.0
    %154 = vmatpush1.msra.mxu0 0.0
    %155 = vmatprep.subr.mxu0 0.0
    %156 = vmatpush1.msra.mxu0 0.0
    %157 = vmatprep.subr.mxu0 0.0
    %158 = vmatpush1.msra.mxu0 0.0
    %159 = vmatprep.subr.mxu0 0.0
    %160 = vmatpush1.msra.mxu0 0.0
    %161 = vmatprep.subr.mxu0 0.0
    %162 = vmatpush1.msra.mxu0 0.0
    %163 = vmatprep.subr.mxu0 0.0
    %164 = vmatpush1.msra.mxu0 0.0
    %165 = vmatprep.subr.mxu0 0.0
    %166 = vmatpush1.msra.mxu0 0.0
    %167 = vmatprep.subr.mxu0 0.0
    %168 = vmatpush1.msra.mxu0 0.0
    %169 = vmatprep.subr.mxu0 0.0
    %170 = vmatpush1.msra.mxu0 0.0
    %171 = vmatprep.subr.mxu0 0.0
    %172 = vmatpush1.msra.mxu0 0.0
    %173 = vmatprep.subr.mxu0 0.0
    %174 = vmatpush1.msra.mxu0 0.0
    %175 = vmatprep.subr.mxu0 0.0
    %176 = vmatpush1.msra.mxu0 0.0
    %177 = vmatprep.subr.mxu0 0.0
    %178 = vmatpush1.msra.mxu0 0.0
    %179 = vmatprep.subr.mxu0 0.0
    %180 = vmatpush1.msra.mxu0 0.0
    %181 = vmatprep.subr.mxu0 0.0
    %182 = vmatpush1.msra.mxu0 0.0
    %183 = vmatprep.subr.mxu0 0.0
    %184 = vmatpush1.msra.mxu0 0.0
    %185 = vmatprep.mubr.f32.mxu0 0.0
    %186 = vmatmul.mubr.f32.gmra.mrb[0].mxu0 %v116
    %v187 = vpop.f32.mrb[0].mxu0
    %v188 = vadd.f32 0.0, %v187
    %v189 = vpop.f32.mrb[0].mxu0
    %190 = vmatprep.mubr.f32.mxu0 0.0
    %191 = vmatmul.mubr.f32.gmra.mrb[0].mxu0 %v119
    %v192 = vpop.f32.mrb[0].mxu0
    %v193 = vadd.f32 0.0, %v192
    %v194 = vpop.f32.mrb[0].mxu0
    %195 = vdwg.mxu0
    %v197 = vsel %vm114, %v73, 0
    %v200 = vsel %vm114, %v74, 0
    %202 = vmatprep.subr.mxu0 0.0
    %203 = vmatpush1.msra.mxu0 %v81
    %204 = vmatprep.subr.mxu0 0.0
    %205 = vmatpush1.msra.mxu0 %v82
    %206 = vmatprep.subr.mxu0 0.0
    %207 = vmatpush1.msra.mxu0 %v83
    %208 = vmatprep.subr.mxu0 0.0
    %209 = vmatpush1.msra.mxu0 %v84
    %210 = vmatprep.subr.mxu0 0.0
    %211 = vmatpush1.msra.mxu0 0.0
    %212 = vmatprep.subr.mxu0 0.0
    %213 = vmatpush1.msra.mxu0 0.0
    %214 = vmatprep.subr.mxu0 0.0
    %215 = vmatpush1.msra.mxu0 0.0
    %216 = vmatprep.subr.mxu0 0.0
    %217 = vmatpush1.msra.mxu0 0.0
    %218 = vmatprep.subr.mxu0 0.0
    %219 = vmatpush1.msra.mxu0 0.0
    %220 = vmatprep.subr.mxu0 0.0
    %221 = vmatpush1.msra.mxu0 0.0
    %222 = vmatprep.subr.mxu0 0.0
    %223 = vmatpush1.msra.mxu0 0.0
    %224 = vmatprep.subr.mxu0 0.0
    %225 = vmatpush1.msra.mxu0 0.0
    %226 = vmatprep.subr.mxu0 0.0
    %227 = vmatpush1.msra.mxu0 0.0
    %228 = vmatprep.subr.mxu0 0.0
    %229 = vmatpush1.msra.mxu0 0.0
    %230 = vmatprep.subr.mxu0 0.0
    %231 = vmatpush1.msra.mxu0 0.0
    %232 = vmatprep.subr.mxu0 0.0
    %233 = vmatpush1.msra.mxu0 0.0
    %234 = vmatprep.subr.mxu0 0.0
    %235 = vmatpush1.msra.mxu0 0.0
    %236 = vmatprep.subr.mxu0 0.0
    %237 = vmatpush1.msra.mxu0 0.0
    %238 = vmatprep.subr.mxu0 0.0
    %239 = vmatpush1.msra.mxu0 0.0
    %240 = vmatprep.subr.mxu0 0.0
    %241 = vmatpush1.msra.mxu0 0.0
    %242 = vmatprep.subr.mxu0 0.0
    %243 = vmatpush1.msra.mxu0 0.0
    %244 = vmatprep.subr.mxu0 0.0
    %245 = vmatpush1.msra.mxu0 0.0
    %246 = vmatprep.subr.mxu0 0.0
    %247 = vmatpush1.msra.mxu0 0.0
    %248 = vmatprep.subr.mxu0 0.0
    %249 = vmatpush1.msra.mxu0 0.0
    %250 = vmatprep.subr.mxu0 0.0
    %251 = vmatpush1.msra.mxu0 0.0
    %252 = vmatprep.subr.mxu0 0.0
    %253 = vmatpush1.msra.mxu0 0.0
    %254 = vmatprep.subr.mxu0 0.0
    %255 = vmatpush1.msra.mxu0 0.0
    %256 = vmatprep.subr.mxu0 0.0
    %257 = vmatpush1.msra.mxu0 0.0
    %258 = vmatprep.subr.mxu0 0.0
    %259 = vmatpush1.msra.mxu0 0.0
    %260 = vmatprep.subr.mxu0 0.0
    %261 = vmatpush1.msra.mxu0 0.0
    %262 = vmatprep.subr.mxu0 0.0
    %263 = vmatpush1.msra.mxu0 0.0
    %264 = vmatprep.subr.mxu0 0.0
    %265 = vmatpush1.msra.mxu0 0.0
    %266 = vmatprep.mubr.f32.mxu0 0.0
    %267 = vmatmul.mubr.f32.gmra.mrb[0].mxu0 %v197
    %v268 = vpop.f32.mrb[0].mxu0
    %v269 = vadd.f32 %v188, %v268
    %v270 = vpop.f32.mrb[0].mxu0
    %271 = vmatprep.mubr.f32.mxu0 0.0
    %272 = vmatmul.mubr.f32.gmra.mrb[0].mxu0 %v200
    %v273 = vpop.f32.mrb[0].mxu0
    %v274 = vadd.f32 %v193, %v273
    %v275 = vpop.f32.mrb[0].mxu0
    %276 = vdwg.mxu0
    %v277 = vlaneseq
    %v278 = vshrl.u32 %v277, 7
    %v279 = vsub.s32 0, %v278
    %v280 = vrot.slane %v97, %v279
    %v281 = vadd.f32 %v269, %v280
    %v282 = vadd.f32 %v274, %v280
    %283 = vrot.lane.b32.xlu0 %v81, 64
    %v284 = vpop.permute.xlu0 %283
    %285 = vrot.lane.b32.xlu0 %v82, 64
    %v286 = vpop.permute.xlu0 %285
    %287 = vrot.lane.b32.xlu0 %v83, 64
    %v288 = vpop.permute.xlu0 %287
    %289 = vrot.lane.b32.xlu0 %v84, 64
    %v290 = vpop.permute.xlu0 %289
    %296 = vrot.lane.b32.xlu0 %v280, 96
    %v297 = vpop.permute.xlu0 %296
    %v300 = vsel %vm114, %v77, 0
    %v303 = vsel %vm114, %v78, 0
    %v306 = vsel %vm114, %v79, 0
    %v309 = vsel %vm114, %v80, 0
    %311 = vmatprep.subr.mxu0 0.0
    %312 = vmatpush1.msra.mxu0 %v284
    %313 = vmatprep.subr.mxu0 0.0
    %314 = vmatpush1.msra.mxu0 %v286
    %315 = vmatprep.subr.mxu0 0.0
    %316 = vmatpush1.msra.mxu0 %v288
    %317 = vmatprep.subr.mxu0 0.0
    %318 = vmatpush1.msra.mxu0 %v290
    %319 = vmatprep.subr.mxu0 0.0
    %320 = vmatpush1.msra.mxu0 0.0
    %321 = vmatprep.subr.mxu0 0.0
    %322 = vmatpush1.msra.mxu0 0.0
    %323 = vmatprep.subr.mxu0 0.0
    %324 = vmatpush1.msra.mxu0 0.0
    %325 = vmatprep.subr.mxu0 0.0
    %326 = vmatpush1.msra.mxu0 0.0
    %327 = vmatprep.subr.mxu0 0.0
    %328 = vmatpush1.msra.mxu0 0.0
    %329 = vmatprep.subr.mxu0 0.0
    %330 = vmatpush1.msra.mxu0 0.0
    %331 = vmatprep.subr.mxu0 0.0
    %332 = vmatpush1.msra.mxu0 0.0
    %333 = vmatprep.subr.mxu0 0.0
    %334 = vmatpush1.msra.mxu0 0.0
    %335 = vmatprep.subr.mxu0 0.0
    %336 = vmatpush1.msra.mxu0 0.0
    %337 = vmatprep.subr.mxu0 0.0
    %338 = vmatpush1.msra.mxu0 0.0
    %339 = vmatprep.subr.mxu0 0.0
    %340 = vmatpush1.msra.mxu0 0.0
    %341 = vmatprep.subr.mxu0 0.0
    %342 = vmatpush1.msra.mxu0 0.0
    %343 = vmatprep.subr.mxu0 0.0
    %344 = vmatpush1.msra.mxu0 0.0
    %345 = vmatprep.subr.mxu0 0.0
    %346 = vmatpush1.msra.mxu0 0.0
    %347 = vmatprep.subr.mxu0 0.0
    %348 = vmatpush1.msra.mxu0 0.0
    %349 = vmatprep.subr.mxu0 0.0
    %350 = vmatpush1.msra.mxu0 0.0
    %351 = vmatprep.subr.mxu0 0.0
    %352 = vmatpush1.msra.mxu0 0.0
    %353 = vmatprep.subr.mxu0 0.0
    %354 = vmatpush1.msra.mxu0 0.0
    %355 = vmatprep.subr.mxu0 0.0
    %356 = vmatpush1.msra.mxu0 0.0
    %357 = vmatprep.subr.mxu0 0.0
    %358 = vmatpush1.msra.mxu0 0.0
    %359 = vmatprep.subr.mxu0 0.0
    %360 = vmatpush1.msra.mxu0 0.0
    %361 = vmatprep.subr.mxu0 0.0
    %362 = vmatpush1.msra.mxu0 0.0
    %363 = vmatprep.subr.mxu0 0.0
    %364 = vmatpush1.msra.mxu0 0.0
    %365 = vmatprep.subr.mxu0 0.0
    %366 = vmatpush1.msra.mxu0 0.0
    %367 = vmatprep.subr.mxu0 0.0
    %368 = vmatpush1.msra.mxu0 0.0
    %369 = vmatprep.subr.mxu0 0.0
    %370 = vmatpush1.msra.mxu0 0.0
    %371 = vmatprep.subr.mxu0 0.0
    %372 = vmatpush1.msra.mxu0 0.0
    %373 = vmatprep.subr.mxu0 0.0
    %374 = vmatpush1.msra.mxu0 0.0
    %375 = vmatprep.mubr.f32.mxu0 0.0
    %376 = vmatmul.mubr.f32.gmra.mrb[0].mxu0 %v300
    %v377 = vpop.f32.mrb[0].mxu0
    %v378 = vadd.f32 %v297, %v377
    %v379 = vpop.f32.mrb[0].mxu0
    %380 = vmatprep.mubr.f32.mxu0 0.0
    %381 = vmatmul.mubr.f32.gmra.mrb[0].mxu0 %v303
    %v382 = vpop.f32.mrb[0].mxu0
    %v383 = vadd.f32 %v297, %v382
    %v384 = vpop.f32.mrb[0].mxu0
    %385 = vmatprep.mubr.f32.mxu0 0.0
    %386 = vmatmul.mubr.f32.gmra.mrb[0].mxu0 %v306
    %v387 = vpop.f32.mrb[0].mxu0
    %v388 = vadd.f32 %v297, %v387
    %v389 = vpop.f32.mrb[0].mxu0
    %390 = vmatprep.mubr.f32.mxu0 0.0
    %391 = vmatmul.mubr.f32.gmra.mrb[0].mxu0 %v309
    %v392 = vpop.f32.mrb[0].mxu0
    %v393 = vadd.f32 %v297, %v392
    %v394 = vpop.f32.mrb[0].mxu0
    %395 = vdwg.mxu0
    %v396 = vlaneseq
    %v397 = vshrl.u32 %v396, 7
    %v398 = vadd.s32 %v397, 8
    %v399 = vlaneseq
    %v400 = vand.u32 %v399, 127
    %vm401 = vcmp.lt.s32.totalorder %v397, 0
    %v402 = vsub.s32 0, %v397
    %v403 = vsel %vm401, %v402, %v397
    %v404 = vshrl.u32 %v403, 1
    %v405 = vand.u32 %v403, 1
    %v406 = vsub.s32 0, %v405
    %v407 = vsel %vm401, %v406, %v405
    %vm408 = vcmp.lt.s32.totalorder %v398, 0
    %v409 = vsub.s32 0, %v398
    %v410 = vsel %vm408, %v409, %v398
    %v411 = vshrl.u32 %v410, 1
    %v412 = vand.u32 %v410, 1
    %v413 = vsub.s32 0, %v412
    %v414 = vsel %vm408, %v413, %v412
    %vm415 = vcmp.ne.s32.totalorder %v407, 0
    %vm416 = vcmp.ne.s32.totalorder %v414, 0
    %vm417 = vcmp.lt.s32.totalorder %v407, 0
    %vm418 = vcmp.lt.s32.totalorder %v414, 0
    %vm419 = vmand %vm417, %vm415
    %vm420 = vmand %vm418, %vm416
    %v421 = vadd.s32 %v407, 2
    %v422 = vadd.s32 %v414, 2
    %v423 = vsel %vm419, %v421, %v407
    %v424 = vsel %vm420, %v422, %v414
    %vm425 = vcmp.lt.s32.totalorder %v400, 0
    %v426 = vsub.s32 0, %v400
    %v427 = vsel %vm425, %v426, %v400
    %v428 = vshrl.u32 %v427, 1
    %v429 = vand.u32 %v427, 1
    %v430 = vsub.s32 0, %v429
    %v431 = vsel %vm425, %v430, %v429
    %vm432 = vcmp.ne.s32.totalorder %v431, 0
    %vm433 = vcmp.lt.s32.totalorder %v431, 0
    %vm434 = vmand %vm433, %vm432
    %v435 = vadd.s32 %v431, 2
    %v436 = vsel %vm434, %v435, %v431
    %vm437 = vcmp.eq.s32.totalorder %v423, %v436
    %vm438 = vcmp.eq.s32.totalorder %v424, %v436
    %v439 = vsel %vm437, 0.0, -1e+30
    %v440 = vsel %vm438, 0.0, -1e+30
    %vm441 = vcmask 64512
    %v443 = vsel %vm441, %v281, 0
    %v446 = vsel %vm441, %v282, 0
    %v449 = vsel %vm441, %v378, 0
    %v452 = vsel %vm441, %v383, 0
    %v455 = vsel %vm441, %v388, 0
    %v458 = vsel %vm441, %v393, 0
    %460 = vmatprep.subr.mxu0 0.0
    %461 = vmatpush1.xpose.msra.mxu0 %v449
    %462 = vmatprep.subr.mxu0 0.0
    %463 = vmatpush1.xpose.msra.mxu0 %v452
    %464 = vmatprep.subr.mxu0 0.0
    %465 = vmatpush1.xpose.msra.mxu0 %v455
    %466 = vmatprep.subr.mxu0 0.0
    %467 = vmatpush1.xpose.msra.mxu0 %v458
    %468 = vmatprep.subr.mxu0 0.0
    %469 = vmatpush1.xpose.msra.mxu0 0.0
    %470 = vmatprep.subr.mxu0 0.0
    %471 = vmatpush1.xpose.msra.mxu0 0.0
    %472 = vmatprep.subr.mxu0 0.0
    %473 = vmatpush1.xpose.msra.mxu0 0.0
    %474 = vmatprep.subr.mxu0 0.0
    %475 = vmatpush1.xpose.msra.mxu0 0.0
    %476 = vmatprep.subr.mxu0 0.0
    %477 = vmatpush1.xpose.msra.mxu0 0.0
    %478 = vmatprep.subr.mxu0 0.0
    %479 = vmatpush1.xpose.msra.mxu0 0.0
    %480 = vmatprep.subr.mxu0 0.0
    %481 = vmatpush1.xpose.msra.mxu0 0.0
    %482 = vmatprep.subr.mxu0 0.0
    %483 = vmatpush1.xpose.msra.mxu0 0.0
    %484 = vmatprep.subr.mxu0 0.0
    %485 = vmatpush1.xpose.msra.mxu0 0.0
    %486 = vmatprep.subr.mxu0 0.0
    %487 = vmatpush1.xpose.msra.mxu0 0.0
    %488 = vmatprep.subr.mxu0 0.0
    %489 = vmatpush1.xpose.msra.mxu0 0.0
    %490 = vmatprep.subr.mxu0 0.0
    %491 = vmatpush1.xpose.msra.mxu0 0.0
    %492 = vmatprep.subr.mxu0 0.0
    %493 = vmatpush1.xpose.msra.mxu0 0.0
    %494 = vmatprep.subr.mxu0 0.0
    %495 = vmatpush1.xpose.msra.mxu0 0.0
    %496 = vmatprep.subr.mxu0 0.0
    %497 = vmatpush1.xpose.msra.mxu0 0.0
    %498 = vmatprep.subr.mxu0 0.0
    %499 = vmatpush1.xpose.msra.mxu0 0.0
    %500 = vmatprep.subr.mxu0 0.0
    %501 = vmatpush1.xpose.msra.mxu0 0.0
    %502 = vmatprep.subr.mxu0 0.0
    %503 = vmatpush1.xpose.msra.mxu0 0.0
    %504 = vmatprep.subr.mxu0 0.0
    %505 = vmatpush1.xpose.msra.mxu0 0.0
    %506 = vmatprep.subr.mxu0 0.0
    %507 = vmatpush1.xpose.msra.mxu0 0.0
    %508 = vmatprep.subr.mxu0 0.0
    %509 = vmatpush1.xpose.msra.mxu0 0.0
    %510 = vmatprep.subr.mxu0 0.0
    %511 = vmatpush1.xpose.msra.mxu0 0.0
    %512 = vmatprep.subr.mxu0 0.0
    %513 = vmatpush1.xpose.msra.mxu0 0.0
    %514 = vmatprep.subr.mxu0 0.0
    %515 = vmatpush1.xpose.msra.mxu0 0.0
    %516 = vmatprep.subr.mxu0 0.0
    %517 = vmatpush1.xpose.msra.mxu0 0.0
    %518 = vmatprep.subr.mxu0 0.0
    %519 = vmatpush1.xpose.msra.mxu0 0.0
    %520 = vmatprep.subr.mxu0 0.0
    %521 = vmatpush1.xpose.msra.mxu0 0.0
    %522 = vmatprep.subr.mxu0 0.0
    %523 = vmatpush1.xpose.msra.mxu0 0.0
    %524 = vmatprep.mubr.f32.mxu0 0.0
    %525 = vmatmul.mubr.f32.gmra.mrb[0].mxu0 %v443
    %v526 = vpop.f32.mrb[0].mxu0
    %v527 = vadd.f32 %v439, %v526
    %v528 = vpop.f32.mrb[0].mxu0
    %529 = vmatprep.mubr.f32.mxu0 0.0
    %530 = vmatmul.mubr.f32.gmra.mrb[0].mxu0 %v446
    %v531 = vpop.f32.mrb[0].mxu0
    %v532 = vadd.f32 %v440, %v531
    %v533 = vpop.f32.mrb[0].mxu0
    %534 = vdwg.mxu0
    %v535 = vsel %vm114, %v527, -inf
    %536 = vmax.xlane.f32.xlu0 %v535
    %v537 = vpop.xlane.xlu0 %536
    %v538 = vsel %vm114, %v532, -inf
    %539 = vmax.xlane.f32.xlu0 %v538
    %v540 = vpop.xlane.xlu0 %539
    %v541 = vsub.f32 %v527, %v537
    %v542 = vsub.f32 %v532, %v540
    %v543 = vmul.f32 %v541, 1.442695
    %v544 = vpow.pop %v543
    %v545 = vmul.f32 %v542, 1.442695
    %v546 = vpow.pop %v545
    %v547 = vsel %vm114, %v544, 0.0
    %548 = vadd.xlane.f32.xlu0 %v547
    %v549 = vpop.xlane.xlu0 %548
    %v550 = vsel %vm114, %v546, 0.0
    %551 = vadd.xlane.f32.xlu0 %v550
    %v552 = vpop.xlane.xlu0 %551
    %v553 = vrcp.pop %v549
    %v554 = vrcp.pop %v552
    %v555 = vmul.f32 %v544, %v553
    %v556 = vmul.f32 %v546, %v554
    %557 = vrot.lane.b32.xlu0 %v378, 96
    %v558 = vpop.permute.xlu0 %557
    %559 = vrot.lane.b32.xlu0 %v383, 96
    %v560 = vpop.permute.xlu0 %559
    %561 = vrot.lane.b32.xlu0 %v388, 96
    %v562 = vpop.permute.xlu0 %561
    %563 = vrot.lane.b32.xlu0 %v393, 96
    %v564 = vpop.permute.xlu0 %563
    %v570 = vsel %vm114, %v555, 0
    %v573 = vsel %vm114, %v556, 0
    %575 = vmatprep.subr.mxu0 0.0
    %576 = vmatpush1.msra.mxu0 %v558
    %577 = vmatprep.subr.mxu0 0.0
    %578 = vmatpush1.msra.mxu0 %v560
    %579 = vmatprep.subr.mxu0 0.0
    %580 = vmatpush1.msra.mxu0 %v562
    %581 = vmatprep.subr.mxu0 0.0
    %582 = vmatpush1.msra.mxu0 %v564
    %583 = vmatprep.subr.mxu0 0.0
    %584 = vmatpush1.msra.mxu0 0.0
    %585 = vmatprep.subr.mxu0 0.0
    %586 = vmatpush1.msra.mxu0 0.0
    %587 = vmatprep.subr.mxu0 0.0
    %588 = vmatpush1.msra.mxu0 0.0
    %589 = vmatprep.subr.mxu0 0.0
    %590 = vmatpush1.msra.mxu0 0.0
    %591 = vmatprep.subr.mxu0 0.0
    %592 = vmatpush1.msra.mxu0 0.0
    %593 = vmatprep.subr.mxu0 0.0
    %594 = vmatpush1.msra.mxu0 0.0
    %595 = vmatprep.subr.mxu0 0.0
    %596 = vmatpush1.msra.mxu0 0.0
    %597 = vmatprep.subr.mxu0 0.0
    %598 = vmatpush1.msra.mxu0 0.0
    %599 = vmatprep.subr.mxu0 0.0
    %600 = vmatpush1.msra.mxu0 0.0
    %601 = vmatprep.subr.mxu0 0.0
    %602 = vmatpush1.msra.mxu0 0.0
    %603 = vmatprep.subr.mxu0 0.0
    %604 = vmatpush1.msra.mxu0 0.0
    %605 = vmatprep.subr.mxu0 0.0
    %606 = vmatpush1.msra.mxu0 0.0
    %607 = vmatprep.subr.mxu0 0.0
    %608 = vmatpush1.msra.mxu0 0.0
    %609 = vmatprep.subr.mxu0 0.0
    %610 = vmatpush1.msra.mxu0 0.0
    %611 = vmatprep.subr.mxu0 0.0
    %612 = vmatpush1.msra.mxu0 0.0
    %613 = vmatprep.subr.mxu0 0.0
    %614 = vmatpush1.msra.mxu0 0.0
    %615 = vmatprep.subr.mxu0 0.0
    %616 = vmatpush1.msra.mxu0 0.0
    %617 = vmatprep.subr.mxu0 0.0
    %618 = vmatpush1.msra.mxu0 0.0
    %619 = vmatprep.subr.mxu0 0.0
    %620 = vmatpush1.msra.mxu0 0.0
    %621 = vmatprep.subr.mxu0 0.0
    %622 = vmatpush1.msra.mxu0 0.0
    %623 = vmatprep.subr.mxu0 0.0
    %624 = vmatpush1.msra.mxu0 0.0
    %625 = vmatprep.subr.mxu0 0.0
    %626 = vmatpush1.msra.mxu0 0.0
    %627 = vmatprep.subr.mxu0 0.0
    %628 = vmatpush1.msra.mxu0 0.0
    %629 = vmatprep.subr.mxu0 0.0
    %630 = vmatpush1.msra.mxu0 0.0
    %631 = vmatprep.subr.mxu0 0.0
    %632 = vmatpush1.msra.mxu0 0.0
    %633 = vmatprep.subr.mxu0 0.0
    %634 = vmatpush1.msra.mxu0 0.0
    %635 = vmatprep.subr.mxu0 0.0
    %636 = vmatpush1.msra.mxu0 0.0
    %637 = vmatprep.subr.mxu0 0.0
    %638 = vmatpush1.msra.mxu0 0.0
    %639 = vmatprep.mubr.f32.mxu0 0.0
    %640 = vmatmul.mubr.f32.gmra.mrb[0].mxu0 %v570
    %v641 = vpop.f32.mrb[0].mxu0
    %v642 = vadd.f32 0.0, %v641
    %v643 = vpop.f32.mrb[0].mxu0
    %644 = vmatprep.mubr.f32.mxu0 0.0
    %645 = vmatmul.mubr.f32.gmra.mrb[0].mxu0 %v573
    %v646 = vpop.f32.mrb[0].mxu0
    %v647 = vadd.f32 0.0, %v646
    %v648 = vpop.f32.mrb[0].mxu0
    %649 = vdwg.mxu0
    %650 = vrot.lane.b32.xlu0 %v281, 120
    %v651 = vpop.permute.xlu0 %650
    %652 = vrot.lane.b32.xlu0 %v282, 120
    %v653 = vpop.permute.xlu0 %652
    %654 = vrot.lane.b32.xlu0 %v378, 120
    %v655 = vpop.permute.xlu0 %654
    %656 = vrot.lane.b32.xlu0 %v383, 120
    %v657 = vpop.permute.xlu0 %656
    %658 = vrot.lane.b32.xlu0 %v388, 120
    %v659 = vpop.permute.xlu0 %658
    %660 = vrot.lane.b32.xlu0 %v393, 120
    %v661 = vpop.permute.xlu0 %660
    %v662 = vsel %vm441, %v651, 0
    %v664 = vsel %vm441, %v653, 0
    %v666 = vsel %vm441, %v655, 0
    %v668 = vsel %vm441, %v657, 0
    %v670 = vsel %vm441, %v659, 0
    %v672 = vsel %vm441, %v661, 0
    %674 = vmatprep.subr.mxu0 0.0
    %675 = vmatpush1.xpose.msra.mxu0 %v666
    %676 = vmatprep.subr.mxu0 0.0
    %677 = vmatpush1.xpose.msra.mxu0 %v668
    %678 = vmatprep.subr.mxu0 0.0
    %679 = vmatpush1.xpose.msra.mxu0 %v670
    %680 = vmatprep.subr.mxu0 0.0
    %681 = vmatpush1.xpose.msra.mxu0 %v672
    %682 = vmatprep.subr.mxu0 0.0
    %683 = vmatpush1.xpose.msra.mxu0 0.0
    %684 = vmatprep.subr.mxu0 0.0
    %685 = vmatpush1.xpose.msra.mxu0 0.0
    %686 = vmatprep.subr.mxu0 0.0
    %687 = vmatpush1.xpose.msra.mxu0 0.0
    %688 = vmatprep.subr.mxu0 0.0
    %689 = vmatpush1.xpose.msra.mxu0 0.0
    %690 = vmatprep.subr.mxu0 0.0
    %691 = vmatpush1.xpose.msra.mxu0 0.0
    %692 = vmatprep.subr.mxu0 0.0
    %693 = vmatpush1.xpose.msra.mxu0 0.0
    %694 = vmatprep.subr.mxu0 0.0
    %695 = vmatpush1.xpose.msra.mxu0 0.0
    %696 = vmatprep.subr.mxu0 0.0
    %697 = vmatpush1.xpose.msra.mxu0 0.0
    %698 = vmatprep.subr.mxu0 0.0
    %699 = vmatpush1.xpose.msra.mxu0 0.0
    %700 = vmatprep.subr.mxu0 0.0
    %701 = vmatpush1.xpose.msra.mxu0 0.0
    %702 = vmatprep.subr.mxu0 0.0
    %703 = vmatpush1.xpose.msra.mxu0 0.0
    %704 = vmatprep.subr.mxu0 0.0
    %705 = vmatpush1.xpose.msra.mxu0 0.0
    %706 = vmatprep.subr.mxu0 0.0
    %707 = vmatpush1.xpose.msra.mxu0 0.0
    %708 = vmatprep.subr.mxu0 0.0
    %709 = vmatpush1.xpose.msra.mxu0 0.0
    %710 = vmatprep.subr.mxu0 0.0
    %711 = vmatpush1.xpose.msra.mxu0 0.0
    %712 = vmatprep.subr.mxu0 0.0
    %713 = vmatpush1.xpose.msra.mxu0 0.0
    %714 = vmatprep.subr.mxu0 0.0
    %715 = vmatpush1.xpose.msra.mxu0 0.0
    %716 = vmatprep.subr.mxu0 0.0
    %717 = vmatpush1.xpose.msra.mxu0 0.0
    %718 = vmatprep.subr.mxu0 0.0
    %719 = vmatpush1.xpose.msra.mxu0 0.0
    %720 = vmatprep.subr.mxu0 0.0
    %721 = vmatpush1.xpose.msra.mxu0 0.0
    %722 = vmatprep.subr.mxu0 0.0
    %723 = vmatpush1.xpose.msra.mxu0 0.0
    %724 = vmatprep.subr.mxu0 0.0
    %725 = vmatpush1.xpose.msra.mxu0 0.0
    %726 = vmatprep.subr.mxu0 0.0
    %727 = vmatpush1.xpose.msra.mxu0 0.0
    %728 = vmatprep.subr.mxu0 0.0
    %729 = vmatpush1.xpose.msra.mxu0 0.0
    %730 = vmatprep.subr.mxu0 0.0
    %731 = vmatpush1.xpose.msra.mxu0 0.0
    %732 = vmatprep.subr.mxu0 0.0
    %733 = vmatpush1.xpose.msra.mxu0 0.0
    %734 = vmatprep.subr.mxu0 0.0
    %735 = vmatpush1.xpose.msra.mxu0 0.0
    %736 = vmatprep.subr.mxu0 0.0
    %737 = vmatpush1.xpose.msra.mxu0 0.0
    %738 = vmatprep.mubr.f32.mxu0 0.0
    %739 = vmatmul.mubr.f32.gmra.mrb[0].mxu0 %v662
    %v740 = vpop.f32.mrb[0].mxu0
    %v741 = vadd.f32 %v439, %v740
    %v742 = vpop.f32.mrb[0].mxu0
    %743 = vmatprep.mubr.f32.mxu0 0.0
    %744 = vmatmul.mubr.f32.gmra.mrb[0].mxu0 %v664
    %v745 = vpop.f32.mrb[0].mxu0
    %v746 = vadd.f32 %v440, %v745
    %v747 = vpop.f32.mrb[0].mxu0
    %748 = vdwg.mxu0
    %v749 = vsel %vm114, %v741, -inf
    %750 = vmax.xlane.f32.xlu0 %v749
    %v751 = vpop.xlane.xlu0 %750
    %v752 = vsel %vm114, %v746, -inf
    %753 = vmax.xlane.f32.xlu0 %v752
    %v754 = vpop.xlane.xlu0 %753
    %v755 = vsub.f32 %v741, %v751
    %v756 = vsub.f32 %v746, %v754
    %v757 = vmul.f32 %v755, 1.442695
    %v758 = vpow.pop %v757
    %v759 = vmul.f32 %v756, 1.442695
    %v760 = vpow.pop %v759
    %v761 = vsel %vm114, %v758, 0.0
    %762 = vadd.xlane.f32.xlu0 %v761
    %v763 = vpop.xlane.xlu0 %762
    %v764 = vsel %vm114, %v760, 0.0
    %765 = vadd.xlane.f32.xlu0 %v764
    %v766 = vpop.xlane.xlu0 %765
    %v767 = vrcp.pop %v763
    %v768 = vrcp.pop %v766
    %v769 = vmul.f32 %v758, %v767
    %v770 = vmul.f32 %v760, %v768
    %771 = vrot.lane.b32.xlu0 %v378, 88
    %v772 = vpop.permute.xlu0 %771
    %773 = vrot.lane.b32.xlu0 %v383, 88
    %v774 = vpop.permute.xlu0 %773
    %775 = vrot.lane.b32.xlu0 %v388, 88
    %v776 = vpop.permute.xlu0 %775
    %777 = vrot.lane.b32.xlu0 %v393, 88
    %v778 = vpop.permute.xlu0 %777
    %v784 = vsel %vm114, %v769, 0
    %v787 = vsel %vm114, %v770, 0
    %789 = vmatprep.subr.mxu0 0.0
    %790 = vmatpush1.msra.mxu0 %v772
    %791 = vmatprep.subr.mxu0 0.0
    %792 = vmatpush1.msra.mxu0 %v774
    %793 = vmatprep.subr.mxu0 0.0
    %794 = vmatpush1.msra.mxu0 %v776
    %795 = vmatprep.subr.mxu0 0.0
    %796 = vmatpush1.msra.mxu0 %v778
    %797 = vmatprep.subr.mxu0 0.0
    %798 = vmatpush1.msra.mxu0 0.0
    %799 = vmatprep.subr.mxu0 0.0
    %800 = vmatpush1.msra.mxu0 0.0
    %801 = vmatprep.subr.mxu0 0.0
    %802 = vmatpush1.msra.mxu0 0.0
    %803 = vmatprep.subr.mxu0 0.0
    %804 = vmatpush1.msra.mxu0 0.0
    %805 = vmatprep.subr.mxu0 0.0
    %806 = vmatpush1.msra.mxu0 0.0
    %807 = vmatprep.subr.mxu0 0.0
    %808 = vmatpush1.msra.mxu0 0.0
    %809 = vmatprep.subr.mxu0 0.0
    %810 = vmatpush1.msra.mxu0 0.0
    %811 = vmatprep.subr.mxu0 0.0
    %812 = vmatpush1.msra.mxu0 0.0
    %813 = vmatprep.subr.mxu0 0.0
    %814 = vmatpush1.msra.mxu0 0.0
    %815 = vmatprep.subr.mxu0 0.0
    %816 = vmatpush1.msra.mxu0 0.0
    %817 = vmatprep.subr.mxu0 0.0
    %818 = vmatpush1.msra.mxu0 0.0
    %819 = vmatprep.subr.mxu0 0.0
    %820 = vmatpush1.msra.mxu0 0.0
    %821 = vmatprep.subr.mxu0 0.0
    %822 = vmatpush1.msra.mxu0 0.0
    %823 = vmatprep.subr.mxu0 0.0
    %824 = vmatpush1.msra.mxu0 0.0
    %825 = vmatprep.subr.mxu0 0.0
    %826 = vmatpush1.msra.mxu0 0.0
    %827 = vmatprep.subr.mxu0 0.0
    %828 = vmatpush1.msra.mxu0 0.0
    %829 = vmatprep.subr.mxu0 0.0
    %830 = vmatpush1.msra.mxu0 0.0
    %831 = vmatprep.subr.mxu0 0.0
    %832 = vmatpush1.msra.mxu0 0.0
    %833 = vmatprep.subr.mxu0 0.0
    %834 = vmatpush1.msra.mxu0 0.0
    %835 = vmatprep.subr.mxu0 0.0
    %836 = vmatpush1.msra.mxu0 0.0
    %837 = vmatprep.subr.mxu0 0.0
    %838 = vmatpush1.msra.mxu0 0.0
    %839 = vmatprep.subr.mxu0 0.0
    %840 = vmatpush1.msra.mxu0 0.0
    %841 = vmatprep.subr.mxu0 0.0
    %842 = vmatpush1.msra.mxu0 0.0
    %843 = vmatprep.subr.mxu0 0.0
    %844 = vmatpush1.msra.mxu0 0.0
    %845 = vmatprep.subr.mxu0 0.0
    %846 = vmatpush1.msra.mxu0 0.0
    %847 = vmatprep.subr.mxu0 0.0
    %848 = vmatpush1.msra.mxu0 0.0
    %849 = vmatprep.subr.mxu0 0.0
    %850 = vmatpush1.msra.mxu0 0.0
    %851 = vmatprep.subr.mxu0 0.0
    %852 = vmatpush1.msra.mxu0 0.0
    %853 = vmatprep.mubr.f32.mxu0 0.0
    %854 = vmatmul.mubr.f32.gmra.mrb[0].mxu0 %v784
    %v855 = vpop.f32.mrb[0].mxu0
    %v856 = vadd.f32 0.0, %v855
    %v857 = vpop.f32.mrb[0].mxu0
    %858 = vmatprep.mubr.f32.mxu0 0.0
    %859 = vmatmul.mubr.f32.gmra.mrb[0].mxu0 %v787
    %v860 = vpop.f32.mrb[0].mxu0
    %v861 = vadd.f32 0.0, %v860
    %v862 = vpop.f32.mrb[0].mxu0
    %863 = vdwg.mxu0
    %864 = vrot.lane.b32.xlu0 %v281, 112
    %v865 = vpop.permute.xlu0 %864
    %866 = vrot.lane.b32.xlu0 %v282, 112
    %v867 = vpop.permute.xlu0 %866
    %868 = vrot.lane.b32.xlu0 %v378, 112
    %v869 = vpop.permute.xlu0 %868
    %870 = vrot.lane.b32.xlu0 %v383, 112
    %v871 = vpop.permute.xlu0 %870
    %872 = vrot.lane.b32.xlu0 %v388, 112
    %v873 = vpop.permute.xlu0 %872
    %874 = vrot.lane.b32.xlu0 %v393, 112
    %v875 = vpop.permute.xlu0 %874
    %v876 = vsel %vm441, %v865, 0
    %v878 = vsel %vm441, %v867, 0
    %v880 = vsel %vm441, %v869, 0
    %v882 = vsel %vm441, %v871, 0
    %v884 = vsel %vm441, %v873, 0
    %v886 = vsel %vm441, %v875, 0
    %888 = vmatprep.subr.mxu0 0.0
    %889 = vmatpush1.xpose.msra.mxu0 %v880
    %890 = vmatprep.subr.mxu0 0.0
    %891 = vmatpush1.xpose.msra.mxu0 %v882
    %892 = vmatprep.subr.mxu0 0.0
    %893 = vmatpush1.xpose.msra.mxu0 %v884
    %894 = vmatprep.subr.mxu0 0.0
    %895 = vmatpush1.xpose.msra.mxu0 %v886
    %896 = vmatprep.subr.mxu0 0.0
    %897 = vmatpush1.xpose.msra.mxu0 0.0
    %898 = vmatprep.subr.mxu0 0.0
    %899 = vmatpush1.xpose.msra.mxu0 0.0
    %900 = vmatprep.subr.mxu0 0.0
    %901 = vmatpush1.xpose.msra.mxu0 0.0
    %902 = vmatprep.subr.mxu0 0.0
    %903 = vmatpush1.xpose.msra.mxu0 0.0
    %904 = vmatprep.subr.mxu0 0.0
    %905 = vmatpush1.xpose.msra.mxu0 0.0
    %906 = vmatprep.subr.mxu0 0.0
    %907 = vmatpush1.xpose.msra.mxu0 0.0
    %908 = vmatprep.subr.mxu0 0.0
    %909 = vmatpush1.xpose.msra.mxu0 0.0
    %910 = vmatprep.subr.mxu0 0.0
    %911 = vmatpush1.xpose.msra.mxu0 0.0
    %912 = vmatprep.subr.mxu0 0.0
    %913 = vmatpush1.xpose.msra.mxu0 0.0
    %914 = vmatprep.subr.mxu0 0.0
    %915 = vmatpush1.xpose.msra.mxu0 0.0
    %916 = vmatprep.subr.mxu0 0.0
    %917 = vmatpush1.xpose.msra.mxu0 0.0
    %918 = vmatprep.subr.mxu0 0.0
    %919 = vmatpush1.xpose.msra.mxu0 0.0
    %920 = vmatprep.subr.mxu0 0.0
    %921 = vmatpush1.xpose.msra.mxu0 0.0
    %922 = vmatprep.subr.mxu0 0.0
    %923 = vmatpush1.xpose.msra.mxu0 0.0
    %924 = vmatprep.subr.mxu0 0.0
    %925 = vmatpush1.xpose.msra.mxu0 0.0
    %926 = vmatprep.subr.mxu0 0.0
    %927 = vmatpush1.xpose.msra.mxu0 0.0
    %928 = vmatprep.subr.mxu0 0.0
    %929 = vmatpush1.xpose.msra.mxu0 0.0
    %930 = vmatprep.subr.mxu0 0.0
    %931 = vmatpush1.xpose.msra.mxu0 0.0
    %932 = vmatprep.subr.mxu0 0.0
    %933 = vmatpush1.xpose.msra.mxu0 0.0
    %934 = vmatprep.subr.mxu0 0.0
    %935 = vmatpush1.xpose.msra.mxu0 0.0
    %936 = vmatprep.subr.mxu0 0.0
    %937 = vmatpush1.xpose.msra.mxu0 0.0
    %938 = vmatprep.subr.mxu0 0.0
    %939 = vmatpush1.xpose.msra.mxu0 0.0
    %940 = vmatprep.subr.mxu0 0.0
    %941 = vmatpush1.xpose.msra.mxu0 0.0
    %942 = vmatprep.subr.mxu0 0.0
    %943 = vmatpush1.xpose.msra.mxu0 0.0
    %944 = vmatprep.subr.mxu0 0.0
    %945 = vmatpush1.xpose.msra.mxu0 0.0
    %946 = vmatprep.subr.mxu0 0.0
    %947 = vmatpush1.xpose.msra.mxu0 0.0
    %948 = vmatprep.subr.mxu0 0.0
    %949 = vmatpush1.xpose.msra.mxu0 0.0
    %950 = vmatprep.subr.mxu0 0.0
    %951 = vmatpush1.xpose.msra.mxu0 0.0
    %952 = vmatprep.mubr.f32.mxu0 0.0
    %953 = vmatmul.mubr.f32.gmra.mrb[0].mxu0 %v876
    %v954 = vpop.f32.mrb[0].mxu0
    %v955 = vadd.f32 %v439, %v954
    %v956 = vpop.f32.mrb[0].mxu0
    %957 = vmatprep.mubr.f32.mxu0 0.0
    %958 = vmatmul.mubr.f32.gmra.mrb[0].mxu0 %v878
    %v959 = vpop.f32.mrb[0].mxu0
    %v960 = vadd.f32 %v440, %v959
    %v961 = vpop.f32.mrb[0].mxu0
    %962 = vdwg.mxu0
    %v963 = vsel %vm114, %v955, -inf
    %964 = vmax.xlane.f32.xlu0 %v963
    %v965 = vpop.xlane.xlu0 %964
    %v966 = vsel %vm114, %v960, -inf
    %967 = vmax.xlane.f32.xlu0 %v966
    %v968 = vpop.xlane.xlu0 %967
    %v969 = vsub.f32 %v955, %v965
    %v970 = vsub.f32 %v960, %v968
    %v971 = vmul.f32 %v969, 1.442695
    %v972 = vpow.pop %v971
    %v973 = vmul.f32 %v970, 1.442695
    %v974 = vpow.pop %v973
    %v975 = vsel %vm114, %v972, 0.0
    %976 = vadd.xlane.f32.xlu0 %v975
    %v977 = vpop.xlane.xlu0 %976
    %v978 = vsel %vm114, %v974, 0.0
    %979 = vadd.xlane.f32.xlu0 %v978
    %v980 = vpop.xlane.xlu0 %979
    %v981 = vrcp.pop %v977
    %v982 = vrcp.pop %v980
    %v983 = vmul.f32 %v972, %v981
    %v984 = vmul.f32 %v974, %v982
    %985 = vrot.lane.b32.xlu0 %v378, 80
    %v986 = vpop.permute.xlu0 %985
    %987 = vrot.lane.b32.xlu0 %v383, 80
    %v988 = vpop.permute.xlu0 %987
    %989 = vrot.lane.b32.xlu0 %v388, 80
    %v990 = vpop.permute.xlu0 %989
    %991 = vrot.lane.b32.xlu0 %v393, 80
    %v992 = vpop.permute.xlu0 %991
    %v998 = vsel %vm114, %v983, 0
    %v1001 = vsel %vm114, %v984, 0
    %1003 = vmatprep.subr.mxu0 0.0
    %1004 = vmatpush1.msra.mxu0 %v986
    %1005 = vmatprep.subr.mxu0 0.0
    %1006 = vmatpush1.msra.mxu0 %v988
    %1007 = vmatprep.subr.mxu0 0.0
    %1008 = vmatpush1.msra.mxu0 %v990
    %1009 = vmatprep.subr.mxu0 0.0
    %1010 = vmatpush1.msra.mxu0 %v992
    %1011 = vmatprep.subr.mxu0 0.0
    %1012 = vmatpush1.msra.mxu0 0.0
    %1013 = vmatprep.subr.mxu0 0.0
    %1014 = vmatpush1.msra.mxu0 0.0
    %1015 = vmatprep.subr.mxu0 0.0
    %1016 = vmatpush1.msra.mxu0 0.0
    %1017 = vmatprep.subr.mxu0 0.0
    %1018 = vmatpush1.msra.mxu0 0.0
    %1019 = vmatprep.subr.mxu0 0.0
    %1020 = vmatpush1.msra.mxu0 0.0
    %1021 = vmatprep.subr.mxu0 0.0
    %1022 = vmatpush1.msra.mxu0 0.0
    %1023 = vmatprep.subr.mxu0 0.0
    %1024 = vmatpush1.msra.mxu0 0.0
    %1025 = vmatprep.subr.mxu0 0.0
    %1026 = vmatpush1.msra.mxu0 0.0
    %1027 = vmatprep.subr.mxu0 0.0
    %1028 = vmatpush1.msra.mxu0 0.0
    %1029 = vmatprep.subr.mxu0 0.0
    %1030 = vmatpush1.msra.mxu0 0.0
    %1031 = vmatprep.subr.mxu0 0.0
    %1032 = vmatpush1.msra.mxu0 0.0
    %1033 = vmatprep.subr.mxu0 0.0
    %1034 = vmatpush1.msra.mxu0 0.0
    %1035 = vmatprep.subr.mxu0 0.0
    %1036 = vmatpush1.msra.mxu0 0.0
    %1037 = vmatprep.subr.mxu0 0.0
    %1038 = vmatpush1.msra.mxu0 0.0
    %1039 = vmatprep.subr.mxu0 0.0
    %1040 = vmatpush1.msra.mxu0 0.0
    %1041 = vmatprep.subr.mxu0 0.0
    %1042 = vmatpush1.msra.mxu0 0.0
    %1043 = vmatprep.subr.mxu0 0.0
    %1044 = vmatpush1.msra.mxu0 0.0
    %1045 = vmatprep.subr.mxu0 0.0
    %1046 = vmatpush1.msra.mxu0 0.0
    %1047 = vmatprep.subr.mxu0 0.0
    %1048 = vmatpush1.msra.mxu0 0.0
    %1049 = vmatprep.subr.mxu0 0.0
    %1050 = vmatpush1.msra.mxu0 0.0
    %1051 = vmatprep.subr.mxu0 0.0
    %1052 = vmatpush1.msra.mxu0 0.0
    %1053 = vmatprep.subr.mxu0 0.0
    %1054 = vmatpush1.msra.mxu0 0.0
    %1055 = vmatprep.subr.mxu0 0.0
    %1056 = vmatpush1.msra.mxu0 0.0
    %1057 = vmatprep.subr.mxu0 0.0
    %1058 = vmatpush1.msra.mxu0 0.0
    %1059 = vmatprep.subr.mxu0 0.0
    %1060 = vmatpush1.msra.mxu0 0.0
    %1061 = vmatprep.subr.mxu0 0.0
    %1062 = vmatpush1.msra.mxu0 0.0
    %1063 = vmatprep.subr.mxu0 0.0
    %1064 = vmatpush1.msra.mxu0 0.0
    %1065 = vmatprep.subr.mxu0 0.0
    %1066 = vmatpush1.msra.mxu0 0.0
    %1067 = vmatprep.mubr.f32.mxu0 0.0
    %1068 = vmatmul.mubr.f32.gmra.mrb[0].mxu0 %v998
    %v1069 = vpop.f32.mrb[0].mxu0
    %v1070 = vadd.f32 0.0, %v1069
    %v1071 = vpop.f32.mrb[0].mxu0
    %1072 = vmatprep.mubr.f32.mxu0 0.0
    %1073 = vmatmul.mubr.f32.gmra.mrb[0].mxu0 %v1001
    %v1074 = vpop.f32.mrb[0].mxu0
    %v1075 = vadd.f32 0.0, %v1074
    %v1076 = vpop.f32.mrb[0].mxu0
    %1077 = vdwg.mxu0
    %1078 = vrot.lane.b32.xlu0 %v281, 104
    %v1079 = vpop.permute.xlu0 %1078
    %1080 = vrot.lane.b32.xlu0 %v282, 104
    %v1081 = vpop.permute.xlu0 %1080
    %1082 = vrot.lane.b32.xlu0 %v378, 104
    %v1083 = vpop.permute.xlu0 %1082
    %1084 = vrot.lane.b32.xlu0 %v383, 104
    %v1085 = vpop.permute.xlu0 %1084
    %1086 = vrot.lane.b32.xlu0 %v388, 104
    %v1087 = vpop.permute.xlu0 %1086
    %1088 = vrot.lane.b32.xlu0 %v393, 104
    %v1089 = vpop.permute.xlu0 %1088
    %v1090 = vsel %vm441, %v1079, 0
    %v1092 = vsel %vm441, %v1081, 0
    %v1094 = vsel %vm441, %v1083, 0
    %v1096 = vsel %vm441, %v1085, 0
    %v1098 = vsel %vm441, %v1087, 0
    %v1100 = vsel %vm441, %v1089, 0
    %1102 = vmatprep.subr.mxu0 0.0
    %1103 = vmatpush1.xpose.msra.mxu0 %v1094
    %1104 = vmatprep.subr.mxu0 0.0
    %1105 = vmatpush1.xpose.msra.mxu0 %v1096
    %1106 = vmatprep.subr.mxu0 0.0
    %1107 = vmatpush1.xpose.msra.mxu0 %v1098
    %1108 = vmatprep.subr.mxu0 0.0
    %1109 = vmatpush1.xpose.msra.mxu0 %v1100
    %1110 = vmatprep.subr.mxu0 0.0
    %1111 = vmatpush1.xpose.msra.mxu0 0.0
    %1112 = vmatprep.subr.mxu0 0.0
    %1113 = vmatpush1.xpose.msra.mxu0 0.0
    %1114 = vmatprep.subr.mxu0 0.0
    %1115 = vmatpush1.xpose.msra.mxu0 0.0
    %1116 = vmatprep.subr.mxu0 0.0
    %1117 = vmatpush1.xpose.msra.mxu0 0.0
    %1118 = vmatprep.subr.mxu0 0.0
    %1119 = vmatpush1.xpose.msra.mxu0 0.0
    %1120 = vmatprep.subr.mxu0 0.0
    %1121 = vmatpush1.xpose.msra.mxu0 0.0
    %1122 = vmatprep.subr.mxu0 0.0
    %1123 = vmatpush1.xpose.msra.mxu0 0.0
    %1124 = vmatprep.subr.mxu0 0.0
    %1125 = vmatpush1.xpose.msra.mxu0 0.0
    %1126 = vmatprep.subr.mxu0 0.0
    %1127 = vmatpush1.xpose.msra.mxu0 0.0
    %1128 = vmatprep.subr.mxu0 0.0
    %1129 = vmatpush1.xpose.msra.mxu0 0.0
    %1130 = vmatprep.subr.mxu0 0.0
    %1131 = vmatpush1.xpose.msra.mxu0 0.0
    %1132 = vmatprep.subr.mxu0 0.0
    %1133 = vmatpush1.xpose.msra.mxu0 0.0
    %1134 = vmatprep.subr.mxu0 0.0
    %1135 = vmatpush1.xpose.msra.mxu0 0.0
    %1136 = vmatprep.subr.mxu0 0.0
    %1137 = vmatpush1.xpose.msra.mxu0 0.0
    %1138 = vmatprep.subr.mxu0 0.0
    %1139 = vmatpush1.xpose.msra.mxu0 0.0
    %1140 = vmatprep.subr.mxu0 0.0
    %1141 = vmatpush1.xpose.msra.mxu0 0.0
    %1142 = vmatprep.subr.mxu0 0.0
    %1143 = vmatpush1.xpose.msra.mxu0 0.0
    %1144 = vmatprep.subr.mxu0 0.0
    %1145 = vmatpush1.xpose.msra.mxu0 0.0
    %1146 = vmatprep.subr.mxu0 0.0
    %1147 = vmatpush1.xpose.msra.mxu0 0.0
    %1148 = vmatprep.subr.mxu0 0.0
    %1149 = vmatpush1.xpose.msra.mxu0 0.0
    %1150 = vmatprep.subr.mxu0 0.0
    %1151 = vmatpush1.xpose.msra.mxu0 0.0
    %1152 = vmatprep.subr.mxu0 0.0
    %1153 = vmatpush1.xpose.msra.mxu0 0.0
    %1154 = vmatprep.subr.mxu0 0.0
    %1155 = vmatpush1.xpose.msra.mxu0 0.0
    %1156 = vmatprep.subr.mxu0 0.0
    %1157 = vmatpush1.xpose.msra.mxu0 0.0
    %1158 = vmatprep.subr.mxu0 0.0
    %1159 = vmatpush1.xpose.msra.mxu0 0.0
    %1160 = vmatprep.subr.mxu0 0.0
    %1161 = vmatpush1.xpose.msra.mxu0 0.0
    %1162 = vmatprep.subr.mxu0 0.0
    %1163 = vmatpush1.xpose.msra.mxu0 0.0
    %1164 = vmatprep.subr.mxu0 0.0
    %1165 = vmatpush1.xpose.msra.mxu0 0.0
    %1166 = vmatprep.mubr.f32.mxu0 0.0
    %1167 = vmatmul.mubr.f32.gmra.mrb[0].mxu0 %v1090
    %v1168 = vpop.f32.mrb[0].mxu0
    %v1169 = vadd.f32 %v439, %v1168
    %v1170 = vpop.f32.mrb[0].mxu0
    %1171 = vmatprep.mubr.f32.mxu0 0.0
    %1172 = vmatmul.mubr.f32.gmra.mrb[0].mxu0 %v1092
    %v1173 = vpop.f32.mrb[0].mxu0
    %v1174 = vadd.f32 %v440, %v1173
    %v1175 = vpop.f32.mrb[0].mxu0
    %1176 = vdwg.mxu0
    %v1177 = vsel %vm114, %v1169, -inf
    %1178 = vmax.xlane.f32.xlu0 %v1177
    %v1179 = vpop.xlane.xlu0 %1178
    %v1180 = vsel %vm114, %v1174, -inf
    %1181 = vmax.xlane.f32.xlu0 %v1180
    %v1182 = vpop.xlane.xlu0 %1181
    %v1183 = vsub.f32 %v1169, %v1179
    %v1184 = vsub.f32 %v1174, %v1182
    %v1185 = vmul.f32 %v1183, 1.442695
    %v1186 = vpow.pop %v1185
    %v1187 = vmul.f32 %v1184, 1.442695
    %v1188 = vpow.pop %v1187
    %v1189 = vsel %vm114, %v1186, 0.0
    %1190 = vadd.xlane.f32.xlu0 %v1189
    %v1191 = vpop.xlane.xlu0 %1190
    %v1192 = vsel %vm114, %v1188, 0.0
    %1193 = vadd.xlane.f32.xlu0 %v1192
    %v1194 = vpop.xlane.xlu0 %1193
    %v1195 = vrcp.pop %v1191
    %v1196 = vrcp.pop %v1194
    %v1197 = vmul.f32 %v1186, %v1195
    %v1198 = vmul.f32 %v1188, %v1196
    %1199 = vrot.lane.b32.xlu0 %v378, 72
    %v1200 = vpop.permute.xlu0 %1199
    %1201 = vrot.lane.b32.xlu0 %v383, 72
    %v1202 = vpop.permute.xlu0 %1201
    %1203 = vrot.lane.b32.xlu0 %v388, 72
    %v1204 = vpop.permute.xlu0 %1203
    %1205 = vrot.lane.b32.xlu0 %v393, 72
    %v1206 = vpop.permute.xlu0 %1205
    %v1212 = vsel %vm114, %v1197, 0
    %v1215 = vsel %vm114, %v1198, 0
    %1217 = vmatprep.subr.mxu0 0.0
    %1218 = vmatpush1.msra.mxu0 %v1200
    %1219 = vmatprep.subr.mxu0 0.0
    %1220 = vmatpush1.msra.mxu0 %v1202
    %1221 = vmatprep.subr.mxu0 0.0
    %1222 = vmatpush1.msra.mxu0 %v1204
    %1223 = vmatprep.subr.mxu0 0.0
    %1224 = vmatpush1.msra.mxu0 %v1206
    %1225 = vmatprep.subr.mxu0 0.0
    %1226 = vmatpush1.msra.mxu0 0.0
    %1227 = vmatprep.subr.mxu0 0.0
    %1228 = vmatpush1.msra.mxu0 0.0
    %1229 = vmatprep.subr.mxu0 0.0
    %1230 = vmatpush1.msra.mxu0 0.0
    %1231 = vmatprep.subr.mxu0 0.0
    %1232 = vmatpush1.msra.mxu0 0.0
    %1233 = vmatprep.subr.mxu0 0.0
    %1234 = vmatpush1.msra.mxu0 0.0
    %1235 = vmatprep.subr.mxu0 0.0
    %1236 = vmatpush1.msra.mxu0 0.0
    %1237 = vmatprep.subr.mxu0 0.0
    %1238 = vmatpush1.msra.mxu0 0.0
    %1239 = vmatprep.subr.mxu0 0.0
    %1240 = vmatpush1.msra.mxu0 0.0
    %1241 = vmatprep.subr.mxu0 0.0
    %1242 = vmatpush1.msra.mxu0 0.0
    %1243 = vmatprep.subr.mxu0 0.0
    %1244 = vmatpush1.msra.mxu0 0.0
    %1245 = vmatprep.subr.mxu0 0.0
    %1246 = vmatpush1.msra.mxu0 0.0
    %1247 = vmatprep.subr.mxu0 0.0
    %1248 = vmatpush1.msra.mxu0 0.0
    %1249 = vmatprep.subr.mxu0 0.0
    %1250 = vmatpush1.msra.mxu0 0.0
    %1251 = vmatprep.subr.mxu0 0.0
    %1252 = vmatpush1.msra.mxu0 0.0
    %1253 = vmatprep.subr.mxu0 0.0
    %1254 = vmatpush1.msra.mxu0 0.0
    %1255 = vmatprep.subr.mxu0 0.0
    %1256 = vmatpush1.msra.mxu0 0.0
    %1257 = vmatprep.subr.mxu0 0.0
    %1258 = vmatpush1.msra.mxu0 0.0
    %1259 = vmatprep.subr.mxu0 0.0
    %1260 = vmatpush1.msra.mxu0 0.0
    %1261 = vmatprep.subr.mxu0 0.0
    %1262 = vmatpush1.msra.mxu0 0.0
    %1263 = vmatprep.subr.mxu0 0.0
    %1264 = vmatpush1.msra.mxu0 0.0
    %1265 = vmatprep.subr.mxu0 0.0
    %1266 = vmatpush1.msra.mxu0 0.0
    %1267 = vmatprep.subr.mxu0 0.0
    %1268 = vmatpush1.msra.mxu0 0.0
    %1269 = vmatprep.subr.mxu0 0.0
    %1270 = vmatpush1.msra.mxu0 0.0
    %1271 = vmatprep.subr.mxu0 0.0
    %1272 = vmatpush1.msra.mxu0 0.0
    %1273 = vmatprep.subr.mxu0 0.0
    %1274 = vmatpush1.msra.mxu0 0.0
    %1275 = vmatprep.subr.mxu0 0.0
    %1276 = vmatpush1.msra.mxu0 0.0
    %1277 = vmatprep.subr.mxu0 0.0
    %1278 = vmatpush1.msra.mxu0 0.0
    %1279 = vmatprep.subr.mxu0 0.0
    %1280 = vmatpush1.msra.mxu0 0.0
    %1281 = vmatprep.mubr.f32.mxu0 0.0
    %1282 = vmatmul.mubr.f32.gmra.mrb[0].mxu0 %v1212
    %v1283 = vpop.f32.mrb[0].mxu0
    %v1284 = vadd.f32 0.0, %v1283
    %v1285 = vpop.f32.mrb[0].mxu0
    %1286 = vmatprep.mubr.f32.mxu0 0.0
    %1287 = vmatmul.mubr.f32.gmra.mrb[0].mxu0 %v1215
    %v1288 = vpop.f32.mrb[0].mxu0
    %v1289 = vadd.f32 0.0, %v1288
    %v1290 = vpop.f32.mrb[0].mxu0
    %1291 = vdwg.mxu0
    %1294 = vrot.lane.b32.xlu0 %v856, 8
    %v1295 = vpop.permute.xlu0 %1294
    %1296 = vrot.lane.b32.xlu0 %v861, 8
    %v1297 = vpop.permute.xlu0 %1296
    %1302 = vrot.lane.b32.xlu0 %v1070, 16
    %v1303 = vpop.permute.xlu0 %1302
    %1304 = vrot.lane.b32.xlu0 %v1075, 16
    %v1305 = vpop.permute.xlu0 %1304
    %1310 = vrot.lane.b32.xlu0 %v1284, 24
    %v1311 = vpop.permute.xlu0 %1310
    %1312 = vrot.lane.b32.xlu0 %v1289, 24
    %v1313 = vpop.permute.xlu0 %1312
    %v1316 = vsel %vm441, %v642, %v1295
    %v1317 = vsel %vm441, %v647, %v1297
    %vm1318 = vcmask 130048
    %v1319 = vsel %vm1318, %v1316, %v1303
    %v1320 = vsel %vm1318, %v1317, %v1305
    %vm1321 = vcmask 195584
    %v1322 = vsel %vm1321, %v1319, %v1311
    %v1323 = vsel %vm1321, %v1320, %v1313
    %v1324 = vlaneseq
    %v1325 = vshrl.u32 %v1324, 7
    %v1326 = vsub.s32 1, %v1325
    %v1327 = vrot.slane %v97, %v1326
    %v1329 = vsel %vm114, %v1322, 0
    %v1332 = vsel %vm114, %v1323, 0
    %1334 = vmatprep.subr.mxu0 0.0
    %1335 = vmatpush1.msra.mxu0 %v85
    %1336 = vmatprep.subr.mxu0 0.0
    %1337 = vmatpush1.msra.mxu0 %v86
    %1338 = vmatprep.subr.mxu0 0.0
    %1339 = vmatpush1.msra.mxu0 %v87
    %1340 = vmatprep.subr.mxu0 0.0
    %1341 = vmatpush1.msra.mxu0 %v88
    %1342 = vmatprep.subr.mxu0 0.0
    %1343 = vmatpush1.msra.mxu0 0.0
    %1344 = vmatprep.subr.mxu0 0.0
    %1345 = vmatpush1.msra.mxu0 0.0
    %1346 = vmatprep.subr.mxu0 0.0
    %1347 = vmatpush1.msra.mxu0 0.0
    %1348 = vmatprep.subr.mxu0 0.0
    %1349 = vmatpush1.msra.mxu0 0.0
    %1350 = vmatprep.subr.mxu0 0.0
    %1351 = vmatpush1.msra.mxu0 0.0
    %1352 = vmatprep.subr.mxu0 0.0
    %1353 = vmatpush1.msra.mxu0 0.0
    %1354 = vmatprep.subr.mxu0 0.0
    %1355 = vmatpush1.msra.mxu0 0.0
    %1356 = vmatprep.subr.mxu0 0.0
    %1357 = vmatpush1.msra.mxu0 0.0
    %1358 = vmatprep.subr.mxu0 0.0
    %1359 = vmatpush1.msra.mxu0 0.0
    %1360 = vmatprep.subr.mxu0 0.0
    %1361 = vmatpush1.msra.mxu0 0.0
    %1362 = vmatprep.subr.mxu0 0.0
    %1363 = vmatpush1.msra.mxu0 0.0
    %1364 = vmatprep.subr.mxu0 0.0
    %1365 = vmatpush1.msra.mxu0 0.0
    %1366 = vmatprep.subr.mxu0 0.0
    %1367 = vmatpush1.msra.mxu0 0.0
    %1368 = vmatprep.subr.mxu0 0.0
    %1369 = vmatpush1.msra.mxu0 0.0
    %1370 = vmatprep.subr.mxu0 0.0
    %1371 = vmatpush1.msra.mxu0 0.0
    %1372 = vmatprep.subr.mxu0 0.0
    %1373 = vmatpush1.msra.mxu0 0.0
    %1374 = vmatprep.subr.mxu0 0.0
    %1375 = vmatpush1.msra.mxu0 0.0
    %1376 = vmatprep.subr.mxu0 0.0
    %1377 = vmatpush1.msra.mxu0 0.0
    %1378 = vmatprep.subr.mxu0 0.0
    %1379 = vmatpush1.msra.mxu0 0.0
    %1380 = vmatprep.subr.mxu0 0.0
    %1381 = vmatpush1.msra.mxu0 0.0
    %1382 = vmatprep.subr.mxu0 0.0
    %1383 = vmatpush1.msra.mxu0 0.0
    %1384 = vmatprep.subr.mxu0 0.0
    %1385 = vmatpush1.msra.mxu0 0.0
    %1386 = vmatprep.subr.mxu0 0.0
    %1387 = vmatpush1.msra.mxu0 0.0
    %1388 = vmatprep.subr.mxu0 0.0
    %1389 = vmatpush1.msra.mxu0 0.0
    %1390 = vmatprep.subr.mxu0 0.0
    %1391 = vmatpush1.msra.mxu0 0.0
    %1392 = vmatprep.subr.mxu0 0.0
    %1393 = vmatpush1.msra.mxu0 0.0
    %1394 = vmatprep.subr.mxu0 0.0
    %1395 = vmatpush1.msra.mxu0 0.0
    %1396 = vmatprep.subr.mxu0 0.0
    %1397 = vmatpush1.msra.mxu0 0.0
    %1398 = vmatprep.mubr.f32.mxu0 0.0
    %1399 = vmatmul.mubr.f32.gmra.mrb[0].mxu0 %v1329
    %v1400 = vpop.f32.mrb[0].mxu0
    %v1401 = vadd.f32 %v1327, %v1400
    %v1402 = vpop.f32.mrb[0].mxu0
    %1403 = vmatprep.mubr.f32.mxu0 0.0
    %1404 = vmatmul.mubr.f32.gmra.mrb[0].mxu0 %v1332
    %v1405 = vpop.f32.mrb[0].mxu0
    %v1406 = vadd.f32 %v1327, %v1405
    %v1407 = vpop.f32.mrb[0].mxu0
    %1408 = vdwg.mxu0
    %v1409 = vsel %vm114, %v1401, 0.0
    %1410 = vadd.xlane.f32.xlu0 %v1409
    %v1411 = vpop.xlane.xlu0 %1410
    %v1412 = vsel %vm114, %v1406, 0.0
    %1413 = vadd.xlane.f32.xlu0 %v1412
    %v1414 = vpop.xlane.xlu0 %1413
    %v1415 = vrcp.pop 32.0
    %v1416 = vmul.f32 %v1411, %v1415
    %v1417 = vmul.f32 %v1414, %v1415
    %v1418 = vsub.f32 %v1401, %v1416
    %v1419 = vsub.f32 %v1406, %v1417
    %v1420 = vmul.f32 %v1418, %v1418
    %v1421 = vmul.f32 %v1419, %v1419
    %v1422 = vsel %vm114, %v1420, 0.0
    %1423 = vadd.xlane.f32.xlu0 %v1422
    %v1424 = vpop.xlane.xlu0 %1423
    %v1425 = vsel %vm114, %v1421, 0.0
    %1426 = vadd.xlane.f32.xlu0 %v1425
    %v1427 = vpop.xlane.xlu0 %1426
    %v1428 = vmul.f32 %v1424, %v1415
    %v1429 = vmul.f32 %v1427, %v1415
    %v1430 = vadd.f32 %v1428, 1e-05
    %v1431 = vadd.f32 %v1429, 1e-05
    %v1432 = vrsqrt.pop %v1430
    %v1433 = vrsqrt.pop %v1431
    %v1434 = vmul.f32 %v1418, %v1432
    %v1435 = vmul.f32 %v1419, %v1433
    %v1436 = vlaneseq
    %v1437 = vshrl.u32 %v1436, 7
    %v1438 = vsub.s32 2, %v1437
    %v1439 = vrot.slane %v97, %v1438
    %v1440 = vmul.f32 %v1434, %v1439
    %v1441 = vmul.f32 %v1435, %v1439
    %v1442 = vlaneseq
    %v1443 = vshrl.u32 %v1442, 7
    %v1444 = vsub.s32 3, %v1443
    %v1445 = vrot.slane %v97, %v1444
    %v1446 = vadd.f32 %v1440, %v1445
    %v1447 = vadd.f32 %v1441, %v1445
    %1452 = vrot.lane.b32.xlu0 %v85, 96
    %v1453 = vpop.permute.xlu0 %1452
    %1454 = vrot.lane.b32.xlu0 %v86, 96
    %v1455 = vpop.permute.xlu0 %1454
    %1456 = vrot.lane.b32.xlu0 %v87, 96
    %v1457 = vpop.permute.xlu0 %1456
    %1458 = vrot.lane.b32.xlu0 %v88, 96
    %v1459 = vpop.permute.xlu0 %1458
    %1465 = vrot.lane.b32.xlu0 %v1327, 96
    %v1466 = vpop.permute.xlu0 %1465
    %v1469 = vsel %vm114, %v1446, 0
    %v1472 = vsel %vm114, %v1447, 0
    %1474 = vmatprep.subr.mxu0 0.0
    %1475 = vmatpush1.msra.mxu0 %v1453
    %1476 = vmatprep.subr.mxu0 0.0
    %1477 = vmatpush1.msra.mxu0 %v1455
    %1478 = vmatprep.subr.mxu0 0.0
    %1479 = vmatpush1.msra.mxu0 %v1457
    %1480 = vmatprep.subr.mxu0 0.0
    %1481 = vmatpush1.msra.mxu0 %v1459
    %1482 = vmatprep.subr.mxu0 0.0
    %1483 = vmatpush1.msra.mxu0 0.0
    %1484 = vmatprep.subr.mxu0 0.0
    %1485 = vmatpush1.msra.mxu0 0.0
    %1486 = vmatprep.subr.mxu0 0.0
    %1487 = vmatpush1.msra.mxu0 0.0
    %1488 = vmatprep.subr.mxu0 0.0
    %1489 = vmatpush1.msra.mxu0 0.0
    %1490 = vmatprep.subr.mxu0 0.0
    %1491 = vmatpush1.msra.mxu0 0.0
    %1492 = vmatprep.subr.mxu0 0.0
    %1493 = vmatpush1.msra.mxu0 0.0
    %1494 = vmatprep.subr.mxu0 0.0
    %1495 = vmatpush1.msra.mxu0 0.0
    %1496 = vmatprep.subr.mxu0 0.0
    %1497 = vmatpush1.msra.mxu0 0.0
    %1498 = vmatprep.subr.mxu0 0.0
    %1499 = vmatpush1.msra.mxu0 0.0
    %1500 = vmatprep.subr.mxu0 0.0
    %1501 = vmatpush1.msra.mxu0 0.0
    %1502 = vmatprep.subr.mxu0 0.0
    %1503 = vmatpush1.msra.mxu0 0.0
    %1504 = vmatprep.subr.mxu0 0.0
    %1505 = vmatpush1.msra.mxu0 0.0
    %1506 = vmatprep.subr.mxu0 0.0
    %1507 = vmatpush1.msra.mxu0 0.0
    %1508 = vmatprep.subr.mxu0 0.0
    %1509 = vmatpush1.msra.mxu0 0.0
    %1510 = vmatprep.subr.mxu0 0.0
    %1511 = vmatpush1.msra.mxu0 0.0
    %1512 = vmatprep.subr.mxu0 0.0
    %1513 = vmatpush1.msra.mxu0 0.0
    %1514 = vmatprep.subr.mxu0 0.0
    %1515 = vmatpush1.msra.mxu0 0.0
    %1516 = vmatprep.subr.mxu0 0.0
    %1517 = vmatpush1.msra.mxu0 0.0
    %1518 = vmatprep.subr.mxu0 0.0
    %1519 = vmatpush1.msra.mxu0 0.0
    %1520 = vmatprep.subr.mxu0 0.0
    %1521 = vmatpush1.msra.mxu0 0.0
    %1522 = vmatprep.subr.mxu0 0.0
    %1523 = vmatpush1.msra.mxu0 0.0
    %1524 = vmatprep.subr.mxu0 0.0
    %1525 = vmatpush1.msra.mxu0 0.0
    %1526 = vmatprep.subr.mxu0 0.0
    %1527 = vmatpush1.msra.mxu0 0.0
    %1528 = vmatprep.subr.mxu0 0.0
    %1529 = vmatpush1.msra.mxu0 0.0
    %1530 = vmatprep.subr.mxu0 0.0
    %1531 = vmatpush1.msra.mxu0 0.0
    %1532 = vmatprep.subr.mxu0 0.0
    %1533 = vmatpush1.msra.mxu0 0.0
    %1534 = vmatprep.subr.mxu0 0.0
    %1535 = vmatpush1.msra.mxu0 0.0
    %1536 = vmatprep.subr.mxu0 0.0
    %1537 = vmatpush1.msra.mxu0 0.0
    %1538 = vmatprep.mubr.f32.mxu0 0.0
    %1539 = vmatmul.mubr.f32.gmra.mrb[0].mxu0 %v1469
    %v1540 = vpop.f32.mrb[0].mxu0
    %v1541 = vadd.f32 %v1466, %v1540
    %v1542 = vpop.f32.mrb[0].mxu0
    %1543 = vmatprep.mubr.f32.mxu0 0.0
    %1544 = vmatmul.mubr.f32.gmra.mrb[0].mxu0 %v1472
    %v1545 = vpop.f32.mrb[0].mxu0
    %v1546 = vadd.f32 %v1466, %v1545
    %v1547 = vpop.f32.mrb[0].mxu0
    %1548 = vdwg.mxu0
    %v1549 = vmax.f32 %v1541, 0.0
    %v1550 = vmax.f32 %v1546, 0.0
    %v1551 = vlaneseq
    %v1552 = vshrl.u32 %v1551, 7
    %v1553 = vsub.s32 4, %v1552
    %v1554 = vrot.slane %v97, %v1553
    %1563 = vrot.lane.b32.xlu0 %v89, 32
    %v1564 = vpop.permute.xlu0 %1563
    %1565 = vrot.lane.b32.xlu0 %v90, 32
    %v1566 = vpop.permute.xlu0 %1565
    %1567 = vrot.lane.b32.xlu0 %v91, 32
    %v1568 = vpop.permute.xlu0 %1567
    %1569 = vrot.lane.b32.xlu0 %v92, 32
    %v1570 = vpop.permute.xlu0 %1569
    %1571 = vrot.lane.b32.xlu0 %v93, 32
    %v1572 = vpop.permute.xlu0 %1571
    %1573 = vrot.lane.b32.xlu0 %v94, 32
    %v1574 = vpop.permute.xlu0 %1573
    %1575 = vrot.lane.b32.xlu0 %v95, 32
    %v1576 = vpop.permute.xlu0 %1575
    %1577 = vrot.lane.b32.xlu0 %v96, 32
    %v1578 = vpop.permute.xlu0 %1577
    %vm1587 = vcmask 523264
    %v1589 = vsel %vm1587, %v1549, 0
    %v1592 = vsel %vm1587, %v1550, 0
    %1594 = vmatprep.subr.mxu0 0.0
    %1595 = vmatpush1.msra.mxu0 %v1564
    %1596 = vmatprep.subr.mxu0 0.0
    %1597 = vmatpush1.msra.mxu0 %v1566
    %1598 = vmatprep.subr.mxu0 0.0
    %1599 = vmatpush1.msra.mxu0 %v1568
    %1600 = vmatprep.subr.mxu0 0.0
    %1601 = vmatpush1.msra.mxu0 %v1570
    %1602 = vmatprep.subr.mxu0 0.0
    %1603 = vmatpush1.msra.mxu0 %v1572
    %1604 = vmatprep.subr.mxu0 0.0
    %1605 = vmatpush1.msra.mxu0 %v1574
    %1606 = vmatprep.subr.mxu0 0.0
    %1607 = vmatpush1.msra.mxu0 %v1576
    %1608 = vmatprep.subr.mxu0 0.0
    %1609 = vmatpush1.msra.mxu0 %v1578
    %1610 = vmatprep.subr.mxu0 0.0
    %1611 = vmatpush1.msra.mxu0 0.0
    %1612 = vmatprep.subr.mxu0 0.0
    %1613 = vmatpush1.msra.mxu0 0.0
    %1614 = vmatprep.subr.mxu0 0.0
    %1615 = vmatpush1.msra.mxu0 0.0
    %1616 = vmatprep.subr.mxu0 0.0
    %1617 = vmatpush1.msra.mxu0 0.0
    %1618 = vmatprep.subr.mxu0 0.0
    %1619 = vmatpush1.msra.mxu0 0.0
    %1620 = vmatprep.subr.mxu0 0.0
    %1621 = vmatpush1.msra.mxu0 0.0
    %1622 = vmatprep.subr.mxu0 0.0
    %1623 = vmatpush1.msra.mxu0 0.0
    %1624 = vmatprep.subr.mxu0 0.0
    %1625 = vmatpush1.msra.mxu0 0.0
    %1626 = vmatprep.subr.mxu0 0.0
    %1627 = vmatpush1.msra.mxu0 0.0
    %1628 = vmatprep.subr.mxu0 0.0
    %1629 = vmatpush1.msra.mxu0 0.0
    %1630 = vmatprep.subr.mxu0 0.0
    %1631 = vmatpush1.msra.mxu0 0.0
    %1632 = vmatprep.subr.mxu0 0.0
    %1633 = vmatpush1.msra.mxu0 0.0
    %1634 = vmatprep.subr.mxu0 0.0
    %1635 = vmatpush1.msra.mxu0 0.0
    %1636 = vmatprep.subr.mxu0 0.0
    %1637 = vmatpush1.msra.mxu0 0.0
    %1638 = vmatprep.subr.mxu0 0.0
    %1639 = vmatpush1.msra.mxu0 0.0
    %1640 = vmatprep.subr.mxu0 0.0
    %1641 = vmatpush1.msra.mxu0 0.0
    %1642 = vmatprep.subr.mxu0 0.0
    %1643 = vmatpush1.msra.mxu0 0.0
    %1644 = vmatprep.subr.mxu0 0.0
    %1645 = vmatpush1.msra.mxu0 0.0
    %1646 = vmatprep.subr.mxu0 0.0
    %1647 = vmatpush1.msra.mxu0 0.0
    %1648 = vmatprep.subr.mxu0 0.0
    %1649 = vmatpush1.msra.mxu0 0.0
    %1650 = vmatprep.subr.mxu0 0.0
    %1651 = vmatpush1.msra.mxu0 0.0
    %1652 = vmatprep.subr.mxu0 0.0
    %1653 = vmatpush1.msra.mxu0 0.0
    %1654 = vmatprep.subr.mxu0 0.0
    %1655 = vmatpush1.msra.mxu0 0.0
    %1656 = vmatprep.subr.mxu0 0.0
    %1657 = vmatpush1.msra.mxu0 0.0
    %1658 = vmatprep.mubr.f32.mxu0 0.0
    %1659 = vmatmul.mubr.f32.gmra.mrb[0].mxu0 %v1589
    %v1660 = vpop.f32.mrb[0].mxu0
    %v1661 = vadd.f32 %v1554, %v1660
    %v1662 = vpop.f32.mrb[0].mxu0
    %1663 = vmatprep.mubr.f32.mxu0 0.0
    %1664 = vmatmul.mubr.f32.gmra.mrb[0].mxu0 %v1592
    %v1665 = vpop.f32.mrb[0].mxu0
    %v1666 = vadd.f32 %v1554, %v1665
    %v1667 = vpop.f32.mrb[0].mxu0
    %1668 = vdwg.mxu0
    %v1669 = vadd.f32 %v1446, %v1661
    %v1670 = vadd.f32 %v1447, %v1666
    %v1671 = vsel %vm114, %v1669, 0.0
    %1672 = vadd.xlane.f32.xlu0 %v1671
    %v1673 = vpop.xlane.xlu0 %1672
    %v1674 = vsel %vm114, %v1670, 0.0
    %1675 = vadd.xlane.f32.xlu0 %v1674
    %v1676 = vpop.xlane.xlu0 %1675
    %v1677 = vmul.f32 %v1673, %v1415
    %v1678 = vmul.f32 %v1676, %v1415
    %v1679 = vsub.f32 %v1669, %v1677
    %v1680 = vsub.f32 %v1670, %v1678
    %v1681 = vmul.f32 %v1679, %v1679
    %v1682 = vmul.f32 %v1680, %v1680
    %v1683 = vsel %vm114, %v1681, 0.0
    %1684 = vadd.xlane.f32.xlu0 %v1683
    %v1685 = vpop.xlane.xlu0 %1684
    %v1686 = vsel %vm114, %v1682, 0.0
    %1687 = vadd.xlane.f32.xlu0 %v1686
    %v1688 = vpop.xlane.xlu0 %1687
    %v1689 = vmul.f32 %v1685, %v1415
    %v1690 = vmul.f32 %v1688, %v1415
    %v1691 = vadd.f32 %v1689, 1e-05
    %v1692 = vadd.f32 %v1690, 1e-05
    %v1693 = vrsqrt.pop %v1691
    %v1694 = vrsqrt.pop %v1692
    %v1695 = vmul.f32 %v1679, %v1693
    %v1696 = vmul.f32 %v1680, %v1694
    %v1697 = vlaneseq
    %v1698 = vshrl.u32 %v1697, 7
    %v1699 = vsub.s32 5, %v1698
    %v1700 = vrot.slane %v97, %v1699
    %v1701 = vmul.f32 %v1695, %v1700
    %v1702 = vmul.f32 %v1696, %v1700
    %v1703 = vlaneseq
    %v1704 = vshrl.u32 %v1703, 7
    %v1705 = vsub.s32 6, %v1704
    %v1706 = vrot.slane %v97, %v1705
    %v1707 = vadd.f32 %v1701, %v1706
    %v1708 = vadd.f32 %v1702, %v1706
    %1709 = vst.msk [vmem:[#allocation10] sm:$0xff] %vm114, %v1707
    %1710 = vst.msk [vmem:[#allocation10 + $0x8] sm:$0xff] %vm114, %v1708
    // Predicated region
    $region34: #{egodeep_attention.1} parent=1 // pred_check
      _
    $region35: #{egodeep_attention.1} parent=1 // pred_check_branch
      %1712 = sbr.rel (0) target = $region37
    $region36: #{egodeep_attention.1} parent=1 // pred_region
      %s1714 = ssub.s32 256, 256
      %1715 = vsyncadd [#allocation4], %s1714
      %s1716 = sshll.u32 [#allocation10], 4
      %s1717 = int_to_ptr.vmem [resolvable:$true] %s1716
      %1722 = dma.vmem_to_hbm [thread:$0]  %s1717, 256, %s4, [#allocation4], 128, 128, 8
    $region37: #{egodeep_attention.1} parent=1 // pred_fallthru
      _
    // Predicated region
    $region38: #{egodeep_attention.1} parent=1 // pred_check
      _
    $region39: #{egodeep_attention.1} parent=1 // pred_check_branch
      %1724 = sbr.rel (0) target = $region41
    $region40: #{egodeep_attention.1} parent=1 // pred_region
      %1725 = dma.done [#allocation4], 256
    $region41: #{egodeep_attention.1} parent=1 // pred_fallthru
      _
    %1726 = vsyncpa [#allocation3], 1
    %1727 = vsyncpa [#allocation6], 1
    %1728 = vsyncpa [#allocation9], 1
    %1729 = vsyncpa [#allocation4], 1

</llo_original>
